<compile_context>
chip_gen: v7x
topology: tpu7x:2x2x1
jax: 0.10.0
libtpu: 0.0.40
codegen_flags: <defaults>
</compile_context>

<pallas_src>
import jax
import jax.numpy as jnp
from jax import lax
from jax.experimental import pallas as pl
from jax.experimental.pallas import tpu as pltpu


def _sigmoid(x):
    # Exact identity sigmoid(x) = 0.5 * tanh(x/2) + 0.5 -> single EUP tanh per gate.
    return 0.5 * jnp.tanh(0.5 * x) + 0.5


def lstm_recurrence_kernel(x_ref, wih_ref, whh_ref, bg_ref, h_out_ref,
                           h_sc, c_sc, xp_sc):
    """One grid step processes one chunk of timesteps.

    x_ref   : (Tc, B, E)   gathered embeddings for this chunk (time-major)
    wih_ref : (E, 4H)      input->gates weights (transposed), single-buffered
    whh_ref : (H, 4H)      recurrent weights (transposed), single-buffered
    bg_ref  : (1, 4H)      b_ih + b_hh, single-buffered
    h_out_ref: (B, H)      final hidden state (written at the last chunk)
    h_sc/c_sc: (B, H)      LSTM state carried across chunks
    xp_sc   : (Tc, B, 4H)  per-chunk input-projection staging buffer
    """
    chunk = pl.program_id(0)

    @pl.when(chunk == 0)
    def _init():
        h_sc[...] = jnp.zeros_like(h_sc)
        c_sc[...] = jnp.zeros_like(c_sc)

    t_chunk, B, E = x_ref.shape
    H = h_sc.shape[-1]

    # Per-chunk input projection: parallel over time -> a single MXU matmul per chunk,
    # hoisted off the serial critical path.  Biases folded in here.
    xp = jnp.dot(x_ref[...].reshape(t_chunk * B, E), wih_ref[...],
                 preferred_element_type=jnp.float32) + bg_ref[...]
    xp_sc[...] = xp.reshape(t_chunk, B, 4 * H)

    whh = whh_ref[...]                                    # hoisted, read once per chunk

    def step(t, carry):
        h, c = carry
        # gates = (x_t @ W_ih^T + b) + h @ W_hh^T
        gates = xp_sc[t] + jnp.dot(h, whh, preferred_element_type=jnp.float32)
        i_g = _sigmoid(gates[:, 0 * H:1 * H])             # lane-aligned slices (H=128)
        f_g = _sigmoid(gates[:, 1 * H:2 * H])
        g_g = jnp.tanh(gates[:, 2 * H:3 * H])
        o_g = _sigmoid(gates[:, 3 * H:4 * H])
        c = f_g * c + i_g * g_g
        h = o_g * jnp.tanh(c)
        return h, c

    # h/c carried in vregs; bounded unroll keeps LLO visibility without code blowup.
    h, c = lax.fori_loop(0, t_chunk, step, (h_sc[...], c_sc[...]),
                         unroll=min(int(t_chunk), 8))
    h_sc[...] = h
    c_sc[...] = c

    @pl.when(chunk == pl.num_programs(0) - 1)
    def _finalize():
        h_out_ref[...] = h.astype(h_out_ref.dtype)


def output_head_kernel(h_ref, wout_ref, bout_ref, o_ref):
    """Linear + log_softmax on the last hidden state (dropout = identity in eval)."""
    logits = (jnp.dot(h_ref[...], wout_ref[...], preferred_element_type=jnp.float32)
              + bout_ref[...])                            # (B, V)
    m = jnp.max(logits, axis=-1, keepdims=True)
    shifted = logits - m
    lse = jnp.log(jnp.sum(jnp.exp(shifted), axis=-1, keepdims=True))
    o_ref[...] = (shifted - lse).astype(o_ref.dtype)


def _pick_t_chunk(T, B, E, budget_bytes=2 << 20):
    """Largest divisor of T that keeps the per-chunk embedding DMA under budget and
    leaves >= 2 chunks so the next chunk's DMA overlaps the current recurrence."""
    divisors = [d for d in range(1, T + 1) if T % d == 0]
    pipelined = [d for d in divisors if d * B * E * 4 <= budget_bytes and T // d >= 2]
    if pipelined:
        return max(pipelined)
    fitting = [d for d in divisors if d * B * E * 4 <= budget_bytes]
    return max(fitting) if fitting else 1


def lstm_model_forward(inputs, params, *, t_chunk=None):
    """inputs: int32 (B, T) token ids. Returns log_probs (B, V) float32."""
    emb = params["embedding"]                             # (V, E)
    w_ih_T = params["w_ih_T"]                             # (E, 4H)
    w_hh_T = params["w_hh_T"]                             # (H, 4H)
    b_gates = params["b_gates"]                           # (1, 4H) = b_ih + b_hh
    w_out_T = params["w_out_T"]                           # (H, V)
    b_out = params["b_out"]                               # (1, V)

    B, T = inputs.shape
    V, E = emb.shape
    H = w_hh_T.shape[0]

    # Gather embeddings only (time-major).  The input->gate projection happens inside
    # the kernel per chunk, so we neither build a (V, 4H) table nor stream (T, B, 4H).
    x_emb = jnp.take(emb, inputs.T, axis=0)               # (T, B, E)

    if t_chunk is None:
        t_chunk = _pick_t_chunk(T, B, E)
    assert T % t_chunk == 0, "t_chunk must divide T"
    n_chunks = T // t_chunk

    const = dict(pipeline_mode=pl.Buffered(1))            # constant-index weights

    h_last = pl.pallas_call(
        lstm_recurrence_kernel,
        out_shape=jax.ShapeDtypeStruct((B, H), jnp.float32),
        grid_spec=pltpu.PrefetchScalarGridSpec(
            num_scalar_prefetch=0,
            grid=(n_chunks,),
            in_specs=[
                pl.BlockSpec((t_chunk, B, E), lambda c: (c, 0, 0)),     # embeddings
                pl.BlockSpec((E, 4 * H), lambda c: (0, 0), **const),    # W_ih^T
                pl.BlockSpec((H, 4 * H), lambda c: (0, 0), **const),    # W_hh^T
                pl.BlockSpec((1, 4 * H), lambda c: (0, 0), **const),    # b_gates
            ],
            out_specs=pl.BlockSpec((B, H), lambda c: (0, 0)),           # resident h
            scratch_shapes=[
                pltpu.VMEM((B, H), jnp.float32),                        # h state
                pltpu.VMEM((B, H), jnp.float32),                        # c state
                pltpu.VMEM((t_chunk, B, 4 * H), jnp.float32),           # xp staging
            ],
        ),
        compiler_params=pltpu.CompilerParams(
            dimension_semantics=("arbitrary",)),          # serial recurrence
    )(x_emb, w_ih_T, w_hh_T, b_gates)

    # Output head as its own pallas_call: W_out never occupies VMEM during the
    # recurrence.  At demo scale the whole (H, V) weight fits in one VMEM block.
    log_probs = pl.pallas_call(
        output_head_kernel,
        out_shape=jax.ShapeDtypeStruct((B, V), jnp.float32),
    )(h_last, w_out_T, b_out)
    return log_probs


def init_params(key, vocab_size, embedding_dim, hidden_dim):
    ks = jax.random.split(key, 7)
    V, E, H = vocab_size, embedding_dim, hidden_dim
    s = 1.0 / jnp.sqrt(jnp.float32(H))
    emb = jax.random.normal(ks[0], (V, E), jnp.float32)
    w_ih = jax.random.uniform(ks[1], (4 * H, E), jnp.float32, -s, s)
    w_hh = jax.random.uniform(ks[2], (4 * H, H), jnp.float32, -s, s)
    b_ih = jax.random.uniform(ks[3], (4 * H,), jnp.float32, -s, s)
    b_hh = jax.random.uniform(ks[4], (4 * H,), jnp.float32, -s, s)
    w_out = jax.random.uniform(ks[5], (V, H), jnp.float32, -s, s)
    b_out = jax.random.uniform(ks[6], (V,), jnp.float32, -s, s)
    return {
        "embedding": emb,
        "w_ih_T": w_ih.T,                                 # (E, 4H)
        "w_hh_T": w_hh.T,                                 # (H, 4H)
        "b_gates": (b_ih + b_hh)[None, :],                # (1, 4H)
        "w_out_T": w_out.T,                               # (H, V)
        "b_out": b_out[None, :],                          # (1, V)
    }


def reference_forward(inputs, params):
    """Pure-JAX reference (same math, i,f,g,o gate order as PyTorch)."""
    emb = params["embedding"]
    x = jnp.take(emb, inputs, axis=0)                     # (B, T, E)
    B, T, E = x.shape
    H = params["w_hh_T"].shape[0]
    h = jnp.zeros((B, H), jnp.float32)
    c = jnp.zeros((B, H), jnp.float32)
    for t in range(T):
        g = x[:, t, :] @ params["w_ih_T"] + h @ params["w_hh_T"] + params["b_gates"]
        i = jax.nn.sigmoid(g[:, 0 * H:1 * H])
        f = jax.nn.sigmoid(g[:, 1 * H:2 * H])
        gg = jnp.tanh(g[:, 2 * H:3 * H])
        o = jax.nn.sigmoid(g[:, 3 * H:4 * H])
        c = f * c + i * gg
        h = o * jnp.tanh(c)
    logits = h @ params["w_out_T"] + params["b_out"]
    return jax.nn.log_softmax(logits, axis=1)


if __name__ == "__main__":
    # Lane/sublane-aligned small shapes: B=8 (sublanes), H=128 (lane tile), V=256.
    VOCAB, EMB, HID = 256, 64, 128
    B, T = 8, 8

    key = jax.random.PRNGKey(0)
    k_param, k_inp = jax.random.split(key)
    params = init_params(k_param, VOCAB, EMB, HID)
    inputs = jax.random.randint(k_inp, (B, T), 0, VOCAB, dtype=jnp.int32)

    log_probs = lstm_model_forward(inputs, params)        # t_chunk auto -> 4, 2 chunks
    log_probs = jax.block_until_ready(log_probs)

    ref = reference_forward(inputs, params)
    assert log_probs.shape == (B, VOCAB)
    assert jnp.allclose(log_probs, ref, atol=2e-4, rtol=2e-4), \
        float(jnp.max(jnp.abs(log_probs - ref)))

    print("KERNEL_OK")
</pallas_src>

<mosaic_0001>
module attributes {stable_mosaic.version = 11 : i64} {
  func.func @lstm_recurrence_kernel(%arg0: i32, %arg1: memref<4x8x64xf32, #tpu.memory_space<vmem>>, %arg2: memref<64x512xf32, #tpu.memory_space<vmem>>, %arg3: memref<128x512xf32, #tpu.memory_space<vmem>>, %arg4: memref<1x512xf32, #tpu.memory_space<vmem>>, %arg5: memref<8x128xf32, #tpu.memory_space<vmem>>, %arg6: memref<8x128xf32, #tpu.memory_space<vmem>>, %arg7: memref<8x128xf32, #tpu.memory_space<vmem>>, %arg8: memref<4x8x512xf32, #tpu.memory_space<vmem>>) attributes {dimension_semantics = [#tpu.dimension_semantics<arbitrary>], iteration_bounds = array<i64: 2>, scalar_prefetch = 0 : i64, scratch_operands = 3 : i64, tpu.core_type = #tpu.core_type<tc>, window_params = [{transform_indices = @transform_0, window_bounds = array<i64: 4, 8, 64>}, {pipeline_mode = #tpu.pipeline_mode<synchronous>, transform_indices = @transform_1, window_bounds = array<i64: 64, 512>}, {pipeline_mode = #tpu.pipeline_mode<synchronous>, transform_indices = @transform_2, window_bounds = array<i64: 128, 512>}, {pipeline_mode = #tpu.pipeline_mode<synchronous>, transform_indices = @transform_3, window_bounds = array<i64: 1, 512>}, {pipeline_mode = #tpu.pipeline_mode<synchronous>, transform_indices = @transform_4, window_bounds = array<i64: 8, 128>}]} {
    %c0_i32 = arith.constant 0 : i32
    %0 = arith.cmpi eq, %arg0, %c0_i32 : i32
    %1 = arith.extui %0 : i1 to i32
    %c0_i32_0 = arith.constant 0 : i32
    %2 = arith.cmpi ne, %1, %c0_i32_0 : i32
    scf.if %2 {
      %cst_71 = arith.constant 0.000000e+00 : f32
      %164 = vector.broadcast %cst_71 : f32 to vector<8x128xf32>
      %c0_72 = arith.constant 0 : index
      %c0_73 = arith.constant 0 : index
      %165 = vector.load %arg6[%c0_72, %c0_73] : memref<8x128xf32, #tpu.memory_space<vmem>>, vector<8x128xf32>
      tpu.vector_store %arg6[%c0_72, %c0_73], %164 {strides = array<i32>} : memref<8x128xf32, #tpu.memory_space<vmem>>, vector<8x128xf32>,
      %cst_74 = arith.constant 0.000000e+00 : f32
      %166 = vector.broadcast %cst_74 : f32 to vector<8x128xf32>
      %c0_75 = arith.constant 0 : index
      %c0_76 = arith.constant 0 : index
      %167 = vector.load %arg7[%c0_75, %c0_76] : memref<8x128xf32, #tpu.memory_space<vmem>>, vector<8x128xf32>
      tpu.vector_store %arg7[%c0_75, %c0_76], %166 {strides = array<i32>} : memref<8x128xf32, #tpu.memory_space<vmem>>, vector<8x128xf32>,
    } else {
    }
    %c0 = arith.constant 0 : index
    %c0_1 = arith.constant 0 : index
    %c0_2 = arith.constant 0 : index
    %3 = vector.load %arg1[%c0, %c0_1, %c0_2] : memref<4x8x64xf32, #tpu.memory_space<vmem>>, vector<4x8x64xf32>
    %4 = vector.shape_cast %3 : vector<4x8x64xf32> to vector<32x64xf32>
    %c0_3 = arith.constant 0 : index
    %c0_4 = arith.constant 0 : index
    %5 = vector.load %arg2[%c0_3, %c0_4] : memref<64x512xf32, #tpu.memory_space<vmem>>, vector<64x512xf32>
    %cst = arith.constant dense<0.000000e+00> : vector<32x512xf32>
    %6 = tpu.matmul %4, %5, %cst {dimension_numbers = #tpu.dot_dimension_numbers<[1], [0], [0], [1], [0, 0, 1, 1], [], []>} : vector<32x64xf32>, vector<64x512xf32>, vector<32x512xf32> -> vector<32x512xf32>
    %c0_5 = arith.constant 0 : index
    %c0_6 = arith.constant 0 : index
    %7 = vector.load %arg4[%c0_5, %c0_6] : memref<1x512xf32, #tpu.memory_space<vmem>>, vector<1x512xf32>
    %8 = vector.broadcast %7 : vector<1x512xf32> to vector<32x512xf32>
    %9 = arith.addf %6, %8 : vector<32x512xf32>
    %10 = vector.shape_cast %9 : vector<32x512xf32> to vector<4x8x512xf32>
    %c0_7 = arith.constant 0 : index
    %c0_8 = arith.constant 0 : index
    %c0_9 = arith.constant 0 : index
    %11 = vector.load %arg8[%c0_7, %c0_8, %c0_9] : memref<4x8x512xf32, #tpu.memory_space<vmem>>, vector<4x8x512xf32>
    tpu.vector_store %arg8[%c0_7, %c0_8, %c0_9], %10 {strides = array<i32>} : memref<4x8x512xf32, #tpu.memory_space<vmem>>, vector<4x8x512xf32>,
    %c0_10 = arith.constant 0 : index
    %c0_11 = arith.constant 0 : index
    %12 = vector.load %arg3[%c0_10, %c0_11] : memref<128x512xf32, #tpu.memory_space<vmem>>, vector<128x512xf32>
    %c0_12 = arith.constant 0 : index
    %c0_13 = arith.constant 0 : index
    %13 = vector.load %arg6[%c0_12, %c0_13] : memref<8x128xf32, #tpu.memory_space<vmem>>, vector<8x128xf32>
    %c0_14 = arith.constant 0 : index
    %c0_15 = arith.constant 0 : index
    %14 = vector.load %arg7[%c0_14, %c0_15] : memref<8x128xf32, #tpu.memory_space<vmem>>, vector<8x128xf32>
    %c0_i32_16 = arith.constant 0 : i32
    %15 = arith.index_cast %c0_i32_16 : i32 to index
    %c0_17 = arith.constant 0 : index
    %c0_18 = arith.constant 0 : index
    %16 = vector.load %arg8[%15, %c0_17, %c0_18] : memref<4x8x512xf32, #tpu.memory_space<vmem>>, vector<1x8x512xf32>
    %17 = vector.shape_cast %16 : vector<1x8x512xf32> to vector<8x512xf32>
    %cst_19 = arith.constant dense<0.000000e+00> : vector<8x512xf32>
    %18 = tpu.matmul %13, %12, %cst_19 {dimension_numbers = #tpu.dot_dimension_numbers<[1], [0], [0], [1], [0, 0, 1, 1], [], []>} : vector<8x128xf32>, vector<128x512xf32>, vector<8x512xf32> -> vector<8x512xf32>
    %19 = arith.addf %17, %18 : vector<8x512xf32>
    %20 = vector.extract_strided_slice %19 {offsets = [0, 0], sizes = [8, 128], strides = [1, 1]} : vector<8x512xf32> to vector<8x128xf32>
    %cst_20 = arith.constant 5.000000e-01 : f32
    %21 = vector.broadcast %cst_20 : f32 to vector<8x128xf32>
    %22 = arith.mulf %21, %20 : vector<8x128xf32>
    %23 = math.tanh %22 : vector<8x128xf32>
    %cst_21 = arith.constant 5.000000e-01 : f32
    %24 = vector.broadcast %cst_21 : f32 to vector<8x128xf32>
    %25 = arith.mulf %24, %23 : vector<8x128xf32>
    %cst_22 = arith.constant 5.000000e-01 : f32
    %26 = vector.broadcast %cst_22 : f32 to vector<8x128xf32>
    %27 = arith.addf %25, %26 : vector<8x128xf32>
    %28 = vector.extract_strided_slice %19 {offsets = [0, 128], sizes = [8, 128], strides = [1, 1]} : vector<8x512xf32> to vector<8x128xf32>
    %cst_23 = arith.constant 5.000000e-01 : f32
    %29 = vector.broadcast %cst_23 : f32 to vector<8x128xf32>
    %30 = arith.mulf %29, %28 : vector<8x128xf32>
    %31 = math.tanh %30 : vector<8x128xf32>
    %cst_24 = arith.constant 5.000000e-01 : f32
    %32 = vector.broadcast %cst_24 : f32 to vector<8x128xf32>
    %33 = arith.mulf %32, %31 : vector<8x128xf32>
    %cst_25 = arith.constant 5.000000e-01 : f32
    %34 = vector.broadcast %cst_25 : f32 to vector<8x128xf32>
    %35 = arith.addf %33, %34 : vector<8x128xf32>
    %36 = vector.extract_strided_slice %19 {offsets = [0, 256], sizes = [8, 128], strides = [1, 1]} : vector<8x512xf32> to vector<8x128xf32>
    %37 = math.tanh %36 : vector<8x128xf32>
    %38 = vector.extract_strided_slice %19 {offsets = [0, 384], sizes = [8, 128], strides = [1, 1]} : vector<8x512xf32> to vector<8x128xf32>
    %cst_26 = arith.constant 5.000000e-01 : f32
    %39 = vector.broadcast %cst_26 : f32 to vector<8x128xf32>
    %40 = arith.mulf %39, %38 : vector<8x128xf32>
    %41 = math.tanh %40 : vector<8x128xf32>
    %cst_27 = arith.constant 5.000000e-01 : f32
    %42 = vector.broadcast %cst_27 : f32 to vector<8x128xf32>
    %43 = arith.mulf %42, %41 : vector<8x128xf32>
    %cst_28 = arith.constant 5.000000e-01 : f32
    %44 = vector.broadcast %cst_28 : f32 to vector<8x128xf32>
    %45 = arith.addf %43, %44 : vector<8x128xf32>
    %46 = arith.mulf %35, %14 : vector<8x128xf32>
    %47 = arith.mulf %27, %37 : vector<8x128xf32>
    %48 = arith.addf %46, %47 : vector<8x128xf32>
    %49 = math.tanh %48 : vector<8x128xf32>
    %50 = arith.mulf %45, %49 : vector<8x128xf32>
    %c1_i32 = arith.constant 1 : i32
    %51 = arith.index_cast %c1_i32 : i32 to index
    %c0_29 = arith.constant 0 : index
    %c0_30 = arith.constant 0 : index
    %52 = vector.load %arg8[%51, %c0_29, %c0_30] : memref<4x8x512xf32, #tpu.memory_space<vmem>>, vector<1x8x512xf32>
    %53 = vector.shape_cast %52 : vector<1x8x512xf32> to vector<8x512xf32>
    %cst_31 = arith.constant dense<0.000000e+00> : vector<8x512xf32>
    %54 = tpu.matmul %50, %12, %cst_31 {dimension_numbers = #tpu.dot_dimension_numbers<[1], [0], [0], [1], [0, 0, 1, 1], [], []>} : vector<8x128xf32>, vector<128x512xf32>, vector<8x512xf32> -> vector<8x512xf32>
    %55 = arith.addf %53, %54 : vector<8x512xf32>
    %56 = vector.extract_strided_slice %55 {offsets = [0, 0], sizes = [8, 128], strides = [1, 1]} : vector<8x512xf32> to vector<8x128xf32>
    %cst_32 = arith.constant 5.000000e-01 : f32
    %57 = vector.broadcast %cst_32 : f32 to vector<8x128xf32>
    %58 = arith.mulf %57, %56 : vector<8x128xf32>
    %59 = math.tanh %58 : vector<8x128xf32>
    %cst_33 = arith.constant 5.000000e-01 : f32
    %60 = vector.broadcast %cst_33 : f32 to vector<8x128xf32>
    %61 = arith.mulf %60, %59 : vector<8x128xf32>
    %cst_34 = arith.constant 5.000000e-01 : f32
    %62 = vector.broadcast %cst_34 : f32 to vector<8x128xf32>
    %63 = arith.addf %61, %62 : vector<8x128xf32>
    %64 = vector.extract_strided_slice %55 {offsets = [0, 128], sizes = [8, 128], strides = [1, 1]} : vector<8x512xf32> to vector<8x128xf32>
    %cst_35 = arith.constant 5.000000e-01 : f32
    %65 = vector.broadcast %cst_35 : f32 to vector<8x128xf32>
    %66 = arith.mulf %65, %64 : vector<8x128xf32>
    %67 = math.tanh %66 : vector<8x128xf32>
    %cst_36 = arith.constant 5.000000e-01 : f32
    %68 = vector.broadcast %cst_36 : f32 to vector<8x128xf32>
    %69 = arith.mulf %68, %67 : vector<8x128xf32>
    %cst_37 = arith.constant 5.000000e-01 : f32
    %70 = vector.broadcast %cst_37 : f32 to vector<8x128xf32>
    %71 = arith.addf %69, %70 : vector<8x128xf32>
    %72 = vector.extract_strided_slice %55 {offsets = [0, 256], sizes = [8, 128], strides = [1, 1]} : vector<8x512xf32> to vector<8x128xf32>
    %73 = math.tanh %72 : vector<8x128xf32>
    %74 = vector.extract_strided_slice %55 {offsets = [0, 384], sizes = [8, 128], strides = [1, 1]} : vector<8x512xf32> to vector<8x128xf32>
    %cst_38 = arith.constant 5.000000e-01 : f32
    %75 = vector.broadcast %cst_38 : f32 to vector<8x128xf32>
    %76 = arith.mulf %75, %74 : vector<8x128xf32>
    %77 = math.tanh %76 : vector<8x128xf32>
    %cst_39 = arith.constant 5.000000e-01 : f32
    %78 = vector.broadcast %cst_39 : f32 to vector<8x128xf32>
    %79 = arith.mulf %78, %77 : vector<8x128xf32>
    %cst_40 = arith.constant 5.000000e-01 : f32
    %80 = vector.broadcast %cst_40 : f32 to vector<8x128xf32>
    %81 = arith.addf %79, %80 : vector<8x128xf32>
    %82 = arith.mulf %71, %48 : vector<8x128xf32>
    %83 = arith.mulf %63, %73 : vector<8x128xf32>
    %84 = arith.addf %82, %83 : vector<8x128xf32>
    %85 = math.tanh %84 : vector<8x128xf32>
    %86 = arith.mulf %81, %85 : vector<8x128xf32>
    %c2_i32 = arith.constant 2 : i32
    %87 = arith.index_cast %c2_i32 : i32 to index
    %c0_41 = arith.constant 0 : index
    %c0_42 = arith.constant 0 : index
    %88 = vector.load %arg8[%87, %c0_41, %c0_42] : memref<4x8x512xf32, #tpu.memory_space<vmem>>, vector<1x8x512xf32>
    %89 = vector.shape_cast %88 : vector<1x8x512xf32> to vector<8x512xf32>
    %cst_43 = arith.constant dense<0.000000e+00> : vector<8x512xf32>
    %90 = tpu.matmul %86, %12, %cst_43 {dimension_numbers = #tpu.dot_dimension_numbers<[1], [0], [0], [1], [0, 0, 1, 1], [], []>} : vector<8x128xf32>, vector<128x512xf32>, vector<8x512xf32> -> vector<8x512xf32>
    %91 = arith.addf %89, %90 : vector<8x512xf32>
    %92 = vector.extract_strided_slice %91 {offsets = [0, 0], sizes = [8, 128], strides = [1, 1]} : vector<8x512xf32> to vector<8x128xf32>
    %cst_44 = arith.constant 5.000000e-01 : f32
    %93 = vector.broadcast %cst_44 : f32 to vector<8x128xf32>
    %94 = arith.mulf %93, %92 : vector<8x128xf32>
    %95 = math.tanh %94 : vector<8x128xf32>
    %cst_45 = arith.constant 5.000000e-01 : f32
    %96 = vector.broadcast %cst_45 : f32 to vector<8x128xf32>
    %97 = arith.mulf %96, %95 : vector<8x128xf32>
    %cst_46 = arith.constant 5.000000e-01 : f32
    %98 = vector.broadcast %cst_46 : f32 to vector<8x128xf32>
    %99 = arith.addf %97, %98 : vector<8x128xf32>
    %100 = vector.extract_strided_slice %91 {offsets = [0, 128], sizes = [8, 128], strides = [1, 1]} : vector<8x512xf32> to vector<8x128xf32>
    %cst_47 = arith.constant 5.000000e-01 : f32
    %101 = vector.broadcast %cst_47 : f32 to vector<8x128xf32>
    %102 = arith.mulf %101, %100 : vector<8x128xf32>
    %103 = math.tanh %102 : vector<8x128xf32>
    %cst_48 = arith.constant 5.000000e-01 : f32
    %104 = vector.broadcast %cst_48 : f32 to vector<8x128xf32>
    %105 = arith.mulf %104, %103 : vector<8x128xf32>
    %cst_49 = arith.constant 5.000000e-01 : f32
    %106 = vector.broadcast %cst_49 : f32 to vector<8x128xf32>
    %107 = arith.addf %105, %106 : vector<8x128xf32>
    %108 = vector.extract_strided_slice %91 {offsets = [0, 256], sizes = [8, 128], strides = [1, 1]} : vector<8x512xf32> to vector<8x128xf32>
    %109 = math.tanh %108 : vector<8x128xf32>
    %110 = vector.extract_strided_slice %91 {offsets = [0, 384], sizes = [8, 128], strides = [1, 1]} : vector<8x512xf32> to vector<8x128xf32>
    %cst_50 = arith.constant 5.000000e-01 : f32
    %111 = vector.broadcast %cst_50 : f32 to vector<8x128xf32>
    %112 = arith.mulf %111, %110 : vector<8x128xf32>
    %113 = math.tanh %112 : vector<8x128xf32>
    %cst_51 = arith.constant 5.000000e-01 : f32
    %114 = vector.broadcast %cst_51 : f32 to vector<8x128xf32>
    %115 = arith.mulf %114, %113 : vector<8x128xf32>
    %cst_52 = arith.constant 5.000000e-01 : f32
    %116 = vector.broadcast %cst_52 : f32 to vector<8x128xf32>
    %117 = arith.addf %115, %116 : vector<8x128xf32>
    %118 = arith.mulf %107, %84 : vector<8x128xf32>
    %119 = arith.mulf %99, %109 : vector<8x128xf32>
    %120 = arith.addf %118, %119 : vector<8x128xf32>
    %121 = math.tanh %120 : vector<8x128xf32>
    %122 = arith.mulf %117, %121 : vector<8x128xf32>
    %c3_i32 = arith.constant 3 : i32
    %123 = arith.index_cast %c3_i32 : i32 to index
    %c0_53 = arith.constant 0 : index
    %c0_54 = arith.constant 0 : index
    %124 = vector.load %arg8[%123, %c0_53, %c0_54] : memref<4x8x512xf32, #tpu.memory_space<vmem>>, vector<1x8x512xf32>
    %125 = vector.shape_cast %124 : vector<1x8x512xf32> to vector<8x512xf32>
    %cst_55 = arith.constant dense<0.000000e+00> : vector<8x512xf32>
    %126 = tpu.matmul %122, %12, %cst_55 {dimension_numbers = #tpu.dot_dimension_numbers<[1], [0], [0], [1], [0, 0, 1, 1], [], []>} : vector<8x128xf32>, vector<128x512xf32>, vector<8x512xf32> -> vector<8x512xf32>
    %127 = arith.addf %125, %126 : vector<8x512xf32>
    %128 = vector.extract_strided_slice %127 {offsets = [0, 0], sizes = [8, 128], strides = [1, 1]} : vector<8x512xf32> to vector<8x128xf32>
    %cst_56 = arith.constant 5.000000e-01 : f32
    %129 = vector.broadcast %cst_56 : f32 to vector<8x128xf32>
    %130 = arith.mulf %129, %128 : vector<8x128xf32>
    %131 = math.tanh %130 : vector<8x128xf32>
    %cst_57 = arith.constant 5.000000e-01 : f32
    %132 = vector.broadcast %cst_57 : f32 to vector<8x128xf32>
    %133 = arith.mulf %132, %131 : vector<8x128xf32>
    %cst_58 = arith.constant 5.000000e-01 : f32
    %134 = vector.broadcast %cst_58 : f32 to vector<8x128xf32>
    %135 = arith.addf %133, %134 : vector<8x128xf32>
    %136 = vector.extract_strided_slice %127 {offsets = [0, 128], sizes = [8, 128], strides = [1, 1]} : vector<8x512xf32> to vector<8x128xf32>
    %cst_59 = arith.constant 5.000000e-01 : f32
    %137 = vector.broadcast %cst_59 : f32 to vector<8x128xf32>
    %138 = arith.mulf %137, %136 : vector<8x128xf32>
    %139 = math.tanh %138 : vector<8x128xf32>
    %cst_60 = arith.constant 5.000000e-01 : f32
    %140 = vector.broadcast %cst_60 : f32 to vector<8x128xf32>
    %141 = arith.mulf %140, %139 : vector<8x128xf32>
    %cst_61 = arith.constant 5.000000e-01 : f32
    %142 = vector.broadcast %cst_61 : f32 to vector<8x128xf32>
    %143 = arith.addf %141, %142 : vector<8x128xf32>
    %144 = vector.extract_strided_slice %127 {offsets = [0, 256], sizes = [8, 128], strides = [1, 1]} : vector<8x512xf32> to vector<8x128xf32>
    %145 = math.tanh %144 : vector<8x128xf32>
    %146 = vector.extract_strided_slice %127 {offsets = [0, 384], sizes = [8, 128], strides = [1, 1]} : vector<8x512xf32> to vector<8x128xf32>
    %cst_62 = arith.constant 5.000000e-01 : f32
    %147 = vector.broadcast %cst_62 : f32 to vector<8x128xf32>
    %148 = arith.mulf %147, %146 : vector<8x128xf32>
    %149 = math.tanh %148 : vector<8x128xf32>
    %cst_63 = arith.constant 5.000000e-01 : f32
    %150 = vector.broadcast %cst_63 : f32 to vector<8x128xf32>
    %151 = arith.mulf %150, %149 : vector<8x128xf32>
    %cst_64 = arith.constant 5.000000e-01 : f32
    %152 = vector.broadcast %cst_64 : f32 to vector<8x128xf32>
    %153 = arith.addf %151, %152 : vector<8x128xf32>
    %154 = arith.mulf %143, %120 : vector<8x128xf32>
    %155 = arith.mulf %135, %145 : vector<8x128xf32>
    %156 = arith.addf %154, %155 : vector<8x128xf32>
    %157 = math.tanh %156 : vector<8x128xf32>
    %158 = arith.mulf %153, %157 : vector<8x128xf32>
    %c4_i32 = arith.constant 4 : i32
    %c0_65 = arith.constant 0 : index
    %c0_66 = arith.constant 0 : index
    %159 = vector.load %arg6[%c0_65, %c0_66] : memref<8x128xf32, #tpu.memory_space<vmem>>, vector<8x128xf32>
    tpu.vector_store %arg6[%c0_65, %c0_66], %158 {strides = array<i32>} : memref<8x128xf32, #tpu.memory_space<vmem>>, vector<8x128xf32>,
    %c0_67 = arith.constant 0 : index
    %c0_68 = arith.constant 0 : index
    %160 = vector.load %arg7[%c0_67, %c0_68] : memref<8x128xf32, #tpu.memory_space<vmem>>, vector<8x128xf32>
    tpu.vector_store %arg7[%c0_67, %c0_68], %156 {strides = array<i32>} : memref<8x128xf32, #tpu.memory_space<vmem>>, vector<8x128xf32>,
    %c1_i32_69 = arith.constant 1 : i32
    %161 = arith.cmpi eq, %arg0, %c1_i32_69 : i32
    %162 = arith.extui %161 : i1 to i32
    %c0_i32_70 = arith.constant 0 : i32
    %163 = arith.cmpi ne, %162, %c0_i32_70 : i32
    scf.if %163 {
      %c0_71 = arith.constant 0 : index
      %c0_72 = arith.constant 0 : index
      %164 = vector.load %arg5[%c0_71, %c0_72] : memref<8x128xf32, #tpu.memory_space<vmem>>, vector<8x128xf32>
      tpu.vector_store %arg5[%c0_71, %c0_72], %158 {strides = array<i32>} : memref<8x128xf32, #tpu.memory_space<vmem>>, vector<8x128xf32>,
    } else {
    }
    return
  }
  func.func @transform_0(%arg0: i32) -> (i32, i32, i32) {
    %c0_i32 = arith.constant 0 : i32
    %c0_i32_0 = arith.constant 0 : i32
    %c0_i32_1 = arith.constant 0 : i32
    return %arg0, %c0_i32, %c0_i32_0 : i32, i32, i32
  }
  func.func @transform_1(%arg0: i32) -> (i32, i32) {
    %c0_i32 = arith.constant 0 : i32
    %c0_i32_0 = arith.constant 0 : i32
    %c0_i32_1 = arith.constant 0 : i32
    return %c0_i32, %c0_i32_0 : i32, i32
  }
  func.func @transform_2(%arg0: i32) -> (i32, i32) {
    %c0_i32 = arith.constant 0 : i32
    %c0_i32_0 = arith.constant 0 : i32
    %c0_i32_1 = arith.constant 0 : i32
    return %c0_i32, %c0_i32_0 : i32, i32
  }
  func.func @transform_3(%arg0: i32) -> (i32, i32) {
    %c0_i32 = arith.constant 0 : i32
    %c0_i32_0 = arith.constant 0 : i32
    %c0_i32_1 = arith.constant 0 : i32
    return %c0_i32, %c0_i32_0 : i32, i32
  }
  func.func @transform_4(%arg0: i32) -> (i32, i32) {
    %c0_i32 = arith.constant 0 : i32
    %c0_i32_0 = arith.constant 0 : i32
    %c0_i32_1 = arith.constant 0 : i32
    return %c0_i32, %c0_i32_0 : i32, i32
  }
}

</mosaic_0001>

<llo_original>
// kernel: tpu_custom_call.1
$region0: #{tpu_custom_call.1}
  #allocation0 [shape = 'u32[]', space=smem, size = 0x4, offset = 0x4, fixed_abs, tag = 'smem constant byte address 0x4 - core index']
  #allocation1 [shape = 'u32[144,128]{1,0:T(1,128)}', space=vmem, size = 0x12000, scoped, tag = 'internal scratch']
  #allocation2 [shape = 'f32[8,128]{1,0:T(8,128)}', space=vmem, size = 0x1000, scoped, tag = 'scratch operand']
  #allocation3 [shape = 'f32[8,128]{1,0:T(8,128)}', space=vmem, size = 0x1000, scoped, tag = 'scratch operand']
  #allocation4 [shape = 'f32[4,8,512]{2,1,0:T(8,128)}', space=vmem, size = 0x10000, scoped, tag = 'scratch operand']
  %s0 = inlined_call_operand.hbm [shape: f32[8,8,64], index: 0, kind: input, shape index: {}]
  %s1 = inlined_call_operand.hbm [shape: f32[64,512], index: 1, kind: input, shape index: {}]
  %s2 = inlined_call_operand.hbm [shape: f32[128,512], index: 2, kind: input, shape index: {}]
  %s3 = inlined_call_operand.vmem [shape: f32[1,512], index: 3, kind: input, shape index: {}]
  %s4 = inlined_call_operand.hbm [shape: f32[8,128], index: 4, kind: output, shape index: {}]
  %s5 = sld [smem:[#allocation0]]
  $region69: #{tpu_custom_call.1} parent=0
    _
  %s7 = ssub.s32 1, %s5
  %s8 = scalar_select 0, %s7, %s5
  $region1: #{tpu_custom_call.1} parent=0
    #allocation5 [shape = 'u8[32768]{0}', space=vmem, size = 0x8000, scoped, tag = 'input window, operand 0']
    #allocation6 [shape = 's32[2]{0}', space=sflag, size = 0x8, scoped, tag = 'scoped memory for tpu_custom_call.1']
    #allocation7 [shape = 's32[2]{0}', space=sflag, size = 0x8, scoped, tag = 'scoped memory for tpu_custom_call.1']
    #allocation8 [shape = 'u8[131072]{0}', space=vmem, size = 0x20000, scoped, tag = 'input window, operand 1, single buffered']
    #allocation9 [shape = 's32[1]{0}', space=sflag, size = 0x4, scoped, tag = 'scoped memory for tpu_custom_call.1']
    #allocation10 [shape = 'u8[262144]{0}', space=vmem, size = 0x40000, scoped, tag = 'input window, operand 2, single buffered']
    #allocation11 [shape = 'u8[4096]{0}', space=vmem, size = 0x1000, scoped, tag = 'output window, operand 0, single buffered']
    %9 = vsyncpa [#allocation6], 0
    %s10 = scalar_lea.sflag [#allocation6], 1
    %11 = vsyncpa %s10, 0
    %12 = vsyncpa [#allocation9], 0
    %13 = vsyncpa [#allocation7], 0
    loop: start=0, step=1, limit=4
    $region2: #{tpu_custom_call.1} parent=1 // loop_pre_header
      _
    $region3: #{tpu_custom_call.1} parent=1 // loop_header
      %s15 = sphi 0, %s19
      %p16 = scmp.ge.s32.totalorder %s15, 4
      %s25 = sphi 0, %s27
      %s28 = sphi 0, %s25
      %s29 = sphi 0, %s28
      %s45 = sphi 0, %s29
      %s49 = sphi 0, %s49
      %s51 = sphi 0, %s49
      %s52 = sphi 0, %s51
      %s66 = sphi 0, %s52
      %s70 = sphi 0, %s70
      %s72 = sphi 0, %s70
      %s73 = sphi 0, %s72
      %s87 = sphi 0, %s73
      %s91 = sphi 0, %s91
      %s93 = sphi 0, %s91
      %s94 = sphi 0, %s93
      %s108 = sphi 0, %s94
      %s112 = sphi 0, %s112
      %s114 = sphi 0, %s112
      %s115 = sphi 0, %s114
      %s129 = sphi 0, %s115
    $region4: #{tpu_custom_call.1} parent=1 // loop_header_branch
      %18 = sbr.rel (%p16) target = $region8
    $region5: #{tpu_custom_call.1} parent=1 // loop_body
      %s20 = ssub.s32 %s15, 1
      %s21 = ssub.s32 %s15, 2
      %s22 = sadd.s32 %s15, 1
      %s23 = ssub.s32 %s15, %s22
      %p24 = scmp.eq.s32.totalorder %s23, 0
      %s26 = sadd.s32 %s25, 1
      %s27 = scalar_select %p24, %s25, %s26
      %p30 = pneg %p24
      %p31 = scmp.eq.s32.totalorder %s15, 1
      %p32 = por %p30, %p31
      %p33 = scmp.ne.s32.totalorder %s25, %s28
      %p34 = scmp.eq.s32.totalorder %s15, 0
      %p35 = por %p33, %p34
      %p36 = scmp.ne.s32.totalorder %s25, %s28
      %p37 = scmp.eq.s32.totalorder %s20, 1
      %p38 = por %p36, %p37
      %p39 = scmp.ne.s32.totalorder %s28, %s29
      %p40 = scmp.eq.s32.totalorder %s20, 0
      %p41 = por %p39, %p40
      %p42 = scmp.ne.s32.totalorder %s28, %s29
      %p43 = scmp.eq.s32.totalorder %s21, 1
      %p44 = por %p42, %p43
      %p46 = scmp.ne.s32.totalorder %s29, %s45
      %p47 = scmp.eq.s32.totalorder %s21, 0
      %p48 = por %p46, %p47
      %s50 = sadd.s32 %s49, 1
      %p53 = scmp.eq.s32.totalorder %s15, 1
      %p54 = scmp.ne.s32.totalorder %s49, %s51
      %p55 = scmp.eq.s32.totalorder %s15, 0
      %p56 = por %p54, %p55
      %p57 = scmp.ne.s32.totalorder %s49, %s51
      %p58 = scmp.eq.s32.totalorder %s20, 1
      %p59 = por %p57, %p58
      %p60 = scmp.ne.s32.totalorder %s51, %s52
      %p61 = scmp.eq.s32.totalorder %s20, 0
      %p62 = por %p60, %p61
      %p63 = scmp.ne.s32.totalorder %s51, %s52
      %p64 = scmp.eq.s32.totalorder %s21, 1
      %p65 = por %p63, %p64
      %p67 = scmp.ne.s32.totalorder %s52, %s66
      %p68 = scmp.eq.s32.totalorder %s21, 0
      %p69 = por %p67, %p68
      %s71 = sadd.s32 %s70, 1
      %p74 = scmp.eq.s32.totalorder %s15, 1
      %p75 = scmp.ne.s32.totalorder %s70, %s72
      %p76 = scmp.eq.s32.totalorder %s15, 0
      %p77 = por %p75, %p76
      %p78 = scmp.ne.s32.totalorder %s70, %s72
      %p79 = scmp.eq.s32.totalorder %s20, 1
      %p80 = por %p78, %p79
      %p81 = scmp.ne.s32.totalorder %s72, %s73
      %p82 = scmp.eq.s32.totalorder %s20, 0
      %p83 = por %p81, %p82
      %p84 = scmp.ne.s32.totalorder %s72, %s73
      %p85 = scmp.eq.s32.totalorder %s21, 1
      %p86 = por %p84, %p85
      %p88 = scmp.ne.s32.totalorder %s73, %s87
      %p89 = scmp.eq.s32.totalorder %s21, 0
      %p90 = por %p88, %p89
      %s92 = sadd.s32 %s91, 1
      %p95 = scmp.eq.s32.totalorder %s15, 1
      %p96 = scmp.ne.s32.totalorder %s91, %s93
      %p97 = scmp.eq.s32.totalorder %s15, 0
      %p98 = por %p96, %p97
      %p99 = scmp.ne.s32.totalorder %s91, %s93
      %p100 = scmp.eq.s32.totalorder %s20, 1
      %p101 = por %p99, %p100
      %p102 = scmp.ne.s32.totalorder %s93, %s94
      %p103 = scmp.eq.s32.totalorder %s20, 0
      %p104 = por %p102, %p103
      %p105 = scmp.ne.s32.totalorder %s93, %s94
      %p106 = scmp.eq.s32.totalorder %s21, 1
      %p107 = por %p105, %p106
      %p109 = scmp.ne.s32.totalorder %s94, %s108
      %p110 = scmp.eq.s32.totalorder %s21, 0
      %p111 = por %p109, %p110
      %s113 = sadd.s32 %s112, 1
      %p116 = scmp.eq.s32.totalorder %s15, 1
      %p117 = scmp.ne.s32.totalorder %s112, %s114
      %p118 = scmp.eq.s32.totalorder %s15, 0
      %p119 = por %p117, %p118
      %p120 = scmp.ne.s32.totalorder %s112, %s114
      %p121 = scmp.eq.s32.totalorder %s20, 1
      %p122 = por %p120, %p121
      %p123 = scmp.ne.s32.totalorder %s114, %s115
      %p124 = scmp.eq.s32.totalorder %s20, 0
      %p125 = por %p123, %p124
      %p126 = scmp.ne.s32.totalorder %s114, %s115
      %p127 = scmp.eq.s32.totalorder %s21, 1
      %p128 = por %p126, %p127
      %p130 = scmp.ne.s32.totalorder %s115, %s129
      %p131 = scmp.eq.s32.totalorder %s21, 0
      %p132 = por %p130, %p131
      %p133 = scmp.le.s32.totalorder 1, %s15
      %p134 = scmp.lt.s32.totalorder %s15, 3
      %p135 = pnand %p133, %p134
      %p136 = pneg %p135
      // Predicated region
      $region9: #{tpu_custom_call.1} parent=5 // pred_check
        _
      $region10: #{tpu_custom_call.1} parent=5 // pred_check_branch
        %138 = sbr.rel (%p135) target = $region12
      $region11: #{tpu_custom_call.1} parent=5 // pred_region
        %s139 = ssub.s32 %s15, 1
        // Predicated region
        $region13: #{tpu_custom_call.1} parent=11 // pred_check
          %p140 = pneg %p62
        $region14: #{tpu_custom_call.1} parent=11 // pred_check_branch
          %142 = sbr.rel (%p140) target = $region16
        $region15: #{tpu_custom_call.1} parent=11 // pred_region
          %s144 = ssub.s32 4096, 4096
          %145 = vsyncadd [#allocation9], %s144
          %s146 = sshll.u32 [#allocation8], 4
          %s147 = int_to_ptr.vmem [resolvable:$true] %s146
          %152 = dma.hbm_to_vmem [thread:$0]  %s1, 4096, %s147, [#allocation9], 512, 512, 32
        $region16: #{tpu_custom_call.1} parent=11 // pred_fallthru
          _
        // Predicated region
        $region17: #{tpu_custom_call.1} parent=11 // pred_check
          %p153 = pneg %p83
        $region18: #{tpu_custom_call.1} parent=11 // pred_check_branch
          %155 = sbr.rel (%p153) target = $region20
        $region19: #{tpu_custom_call.1} parent=11 // pred_region
          %s157 = ssub.s32 8192, 8192
          %158 = vsyncadd [#allocation9], %s157
          %s159 = sshll.u32 [#allocation10], 4
          %s160 = int_to_ptr.vmem [resolvable:$true] %s159
          %165 = dma.hbm_to_vmem [thread:$0]  %s2, 8192, %s160, [#allocation9], 512, 512, 32
        $region20: #{tpu_custom_call.1} parent=11 // pred_fallthru
          _
        // Predicated region
        $region21: #{tpu_custom_call.1} parent=11 // pred_check
          %p166 = pneg %p104
        $region22: #{tpu_custom_call.1} parent=11 // pred_check_branch
          %168 = sbr.rel (%p166) target = $region24
        $region23: #{tpu_custom_call.1} parent=11 // pred_region
          _
        $region24: #{tpu_custom_call.1} parent=11 // pred_fallthru
          _
      $region12: #{tpu_custom_call.1} parent=5 // pred_fallthru
        _
      %p169 = scmp.lt.s32.totalorder %s15, 2
      // Predicated region
      $region25: #{tpu_custom_call.1} parent=5 // pred_check
        %p170 = pneg %p169
      $region26: #{tpu_custom_call.1} parent=5 // pred_check_branch
        %172 = sbr.rel (%p170) target = $region28
      $region27: #{tpu_custom_call.1} parent=5 // pred_region
        // Predicated region
        $region29: #{tpu_custom_call.1} parent=27 // pred_check
          %p173 = pneg %p35
        $region30: #{tpu_custom_call.1} parent=27 // pred_check_branch
          %175 = sbr.rel (%p173) target = $region32
        $region31: #{tpu_custom_call.1} parent=27 // pred_region
          %s176 = sand.u32 %s25, 1
          %s177 = scalar_lea.sflag [#allocation6], %s176
          %s178 = sand.u32 %s25, 1
          %s179 = smul.addr %s178, 32
          %s180 = scalar_lea.vmem [#allocation5], %s179
          %s181 = smul.u32 4, %s15
          %s183 = ssub.s32 512, 512
          %184 = vsyncadd %s177, %s183
          %s185 = smul.addr %s181, 128
          %s186 = scalar_lea.hbm %s0, %s185
          %s187 = sshll.u32 %s180, 4
          %s188 = int_to_ptr.vmem [resolvable:$true] %s187
          %193 = dma.hbm_to_vmem [thread:$0]  %s186, 512, %s188, %s177, 128, 128, 8
        $region32: #{tpu_custom_call.1} parent=27 // pred_fallthru
          _
      $region28: #{tpu_custom_call.1} parent=5 // pred_fallthru
        _
      %p194 = scmp.le.s32.totalorder 1, %s15
      %p195 = scmp.lt.s32.totalorder %s15, 3
      %p196 = pnand %p194, %p195
      %p197 = pneg %p196
      // Predicated region
      $region33: #{tpu_custom_call.1} parent=5 // pred_check
        _
      $region34: #{tpu_custom_call.1} parent=5 // pred_check_branch
        %199 = sbr.rel (%p196) target = $region36
      $region35: #{tpu_custom_call.1} parent=5 // pred_region
        %s200 = ssub.s32 %s15, 1
        %s201 = sand.u32 %s28, 1
        %s202 = scalar_lea.sflag [#allocation6], %s201
        %s203 = sand.u32 %s28, 1
        %s204 = smul.addr %s203, 32
        %s205 = scalar_lea.vmem [#allocation5], %s204
        // Predicated region
        $region37: #{tpu_custom_call.1} parent=35 // pred_check
          %p206 = pneg %p41
        $region38: #{tpu_custom_call.1} parent=35 // pred_check_branch
          %208 = sbr.rel (%p206) target = $region40
        $region39: #{tpu_custom_call.1} parent=35 // pred_region
          %209 = dma.done %s202, 512
        $region40: #{tpu_custom_call.1} parent=35 // pred_fallthru
          _
        // Predicated region
        $region41: #{tpu_custom_call.1} parent=35 // pred_check
          %p210 = pneg %p62
        $region42: #{tpu_custom_call.1} parent=35 // pred_check_branch
          %212 = sbr.rel (%p210) target = $region44
        $region43: #{tpu_custom_call.1} parent=35 // pred_region
          %213 = dma.done [#allocation9], 4096
        $region44: #{tpu_custom_call.1} parent=35 // pred_fallthru
          _
        // Predicated region
        $region45: #{tpu_custom_call.1} parent=35 // pred_check
          %p214 = pneg %p83
        $region46: #{tpu_custom_call.1} parent=35 // pred_check_branch
          %216 = sbr.rel (%p214) target = $region48
        $region47: #{tpu_custom_call.1} parent=35 // pred_region
          %217 = dma.done [#allocation9], 8192
        $region48: #{tpu_custom_call.1} parent=35 // pred_fallthru
          _
        %s218 = sand.u32 %s28, 1
        %s219 = scalar_lea.sflag [#allocation6], %s218
        %s220 = sand.u32 %s28, 1
        %s221 = smul.addr %s220, 32
        %s222 = scalar_lea.vmem [#allocation5], %s221
        %p223 = pneg %p41
        %p224 = pneg %p38
        %p225 = pneg %p62
        %p226 = pneg %p59
        %p227 = pneg %p83
        %p228 = pneg %p80
        %p229 = pneg %p104
        %p230 = pneg %p101
        %p231 = pneg %p125
        %p232 = pneg %p122
        %s233 = smul.u32 4, %s20
        %p234 = scmp.eq.s32.totalorder %s20, 0
        // Predicated region
        $region49: #{tpu_custom_call.1} parent=35 // pred_check
          %p235 = pneg %p234
        $region50: #{tpu_custom_call.1} parent=35 // pred_check_branch
          %237 = sbr.rel (%p235) target = $region52
        $region51: #{tpu_custom_call.1} parent=35 // pred_region
          %238 = vst [vmem:[#allocation2] sm:$0xff] 0.0
          %239 = vst [vmem:[#allocation3] sm:$0xff] 0.0
        $region52: #{tpu_custom_call.1} parent=35 // pred_fallthru
          _
        %v240 = vld [vmem:[%s205] sm:$0xff]
        %v241 = vld [vmem:[%s205 + $0x8] sm:$0xff]
        %v242 = vld [vmem:[%s205 + $0x10] sm:$0xff]
        %v243 = vld [vmem:[%s205 + $0x18] sm:$0xff]
        %v244 = vld [vmem:[#allocation8] sm:$0xff]
        %v245 = vld [vmem:[#allocation8 + $0x8] sm:$0xff]
        %v246 = vld [vmem:[#allocation8 + $0x10] sm:$0xff]
        %v247 = vld [vmem:[#allocation8 + $0x18] sm:$0xff]
        %v248 = vld [vmem:[#allocation8 + $0x20] sm:$0xff]
        %v249 = vld [vmem:[#allocation8 + $0x28] sm:$0xff]
        %v250 = vld [vmem:[#allocation8 + $0x30] sm:$0xff]
        %v251 = vld [vmem:[#allocation8 + $0x38] sm:$0xff]
        %v252 = vld [vmem:[#allocation8 + $0x40] sm:$0xff]
        %v253 = vld [vmem:[#allocation8 + $0x48] sm:$0xff]
        %v254 = vld [vmem:[#allocation8 + $0x50] sm:$0xff]
        %v255 = vld [vmem:[#allocation8 + $0x58] sm:$0xff]
        %v256 = vld [vmem:[#allocation8 + $0x60] sm:$0xff]
        %v257 = vld [vmem:[#allocation8 + $0x68] sm:$0xff]
        %v258 = vld [vmem:[#allocation8 + $0x70] sm:$0xff]
        %v259 = vld [vmem:[#allocation8 + $0x78] sm:$0xff]
        %v260 = vld [vmem:[#allocation8 + $0x80] sm:$0xff]
        %v261 = vld [vmem:[#allocation8 + $0x88] sm:$0xff]
        %v262 = vld [vmem:[#allocation8 + $0x90] sm:$0xff]
        %v263 = vld [vmem:[#allocation8 + $0x98] sm:$0xff]
        %v264 = vld [vmem:[#allocation8 + $0xa0] sm:$0xff]
        %v265 = vld [vmem:[#allocation8 + $0xa8] sm:$0xff]
        %v266 = vld [vmem:[#allocation8 + $0xb0] sm:$0xff]
        %v267 = vld [vmem:[#allocation8 + $0xb8] sm:$0xff]
        %v268 = vld [vmem:[#allocation8 + $0xc0] sm:$0xff]
        %v269 = vld [vmem:[#allocation8 + $0xc8] sm:$0xff]
        %v270 = vld [vmem:[#allocation8 + $0xd0] sm:$0xff]
        %v271 = vld [vmem:[#allocation8 + $0xd8] sm:$0xff]
        %v272 = vld [vmem:[#allocation8 + $0xe0] sm:$0xff]
        %v273 = vld [vmem:[#allocation8 + $0xe8] sm:$0xff]
        %v274 = vld [vmem:[#allocation8 + $0xf0] sm:$0xff]
        %v275 = vld [vmem:[#allocation8 + $0xf8] sm:$0xff]
        %v276 = vld [vmem:[%s3] sm:$0xf]
        %v278 = vlaneseq
        %v279 = vshrl.u32 %v278, 7
        %v280 = vsub.s32 0, %v279
        %v281 = vrot.slane %v276, %v280
        %v282 = vlaneseq
        %v283 = vshrl.u32 %v282, 7
        %v284 = vsub.s32 1, %v283
        %v285 = vrot.slane %v276, %v284
        %v286 = vlaneseq
        %v287 = vshrl.u32 %v286, 7
        %v288 = vsub.s32 2, %v287
        %v289 = vrot.slane %v276, %v288
        %v290 = vlaneseq
        %v291 = vshrl.u32 %v290, 7
        %v292 = vsub.s32 3, %v291
        %v293 = vrot.slane %v276, %v292
        %vm298 = vcmask 523264
        %v300 = vsel %vm298, %v240, 0
        %v303 = vsel %vm298, %v241, 0
        %v306 = vsel %vm298, %v242, 0
        %v309 = vsel %vm298, %v243, 0
        %311 = vmatprep.subr.mxu0 %v245
        %312 = vmatpush1.msra.mxu0 %v244
        %313 = vmatprep.subr.mxu0 %v249
        %314 = vmatpush1.msra.mxu0 %v248
        %315 = vmatprep.subr.mxu0 %v253
        %316 = vmatpush1.msra.mxu0 %v252
        %317 = vmatprep.subr.mxu0 %v257
        %318 = vmatpush1.msra.mxu0 %v256
        %319 = vmatprep.subr.mxu0 %v261
        %320 = vmatpush1.msra.mxu0 %v260
        %321 = vmatprep.subr.mxu0 %v265
        %322 = vmatpush1.msra.mxu0 %v264
        %323 = vmatprep.subr.mxu0 %v269
        %324 = vmatpush1.msra.mxu0 %v268
        %325 = vmatprep.subr.mxu0 %v273
        %326 = vmatpush1.msra.mxu0 %v272
        %327 = vmatprep.subr.mxu0 0.0
        %328 = vmatpush1.msra.mxu0 0.0
        %329 = vmatprep.subr.mxu0 0.0
        %330 = vmatpush1.msra.mxu0 0.0
        %331 = vmatprep.subr.mxu0 0.0
        %332 = vmatpush1.msra.mxu0 0.0
        %333 = vmatprep.subr.mxu0 0.0
        %334 = vmatpush1.msra.mxu0 0.0
        %335 = vmatprep.subr.mxu0 0.0
        %336 = vmatpush1.msra.mxu0 0.0
        %337 = vmatprep.subr.mxu0 0.0
        %338 = vmatpush1.msra.mxu0 0.0
        %339 = vmatprep.subr.mxu0 0.0
        %340 = vmatpush1.msra.mxu0 0.0
        %341 = vmatprep.subr.mxu0 0.0
        %342 = vmatpush1.msra.mxu0 0.0
        %343 = vmatprep.subr.mxu0 0.0
        %344 = vmatpush1.msra.mxu0 0.0
        %345 = vmatprep.subr.mxu0 0.0
        %346 = vmatpush1.msra.mxu0 0.0
        %347 = vmatprep.subr.mxu0 0.0
        %348 = vmatpush1.msra.mxu0 0.0
        %349 = vmatprep.subr.mxu0 0.0
        %350 = vmatpush1.msra.mxu0 0.0
        %351 = vmatprep.subr.mxu0 0.0
        %352 = vmatpush1.msra.mxu0 0.0
        %353 = vmatprep.subr.mxu0 0.0
        %354 = vmatpush1.msra.mxu0 0.0
        %355 = vmatprep.subr.mxu0 0.0
        %356 = vmatpush1.msra.mxu0 0.0
        %357 = vmatprep.subr.mxu0 0.0
        %358 = vmatpush1.msra.mxu0 0.0
        %359 = vmatprep.subr.mxu0 0.0
        %360 = vmatpush1.msra.mxu0 0.0
        %361 = vmatprep.subr.mxu0 0.0
        %362 = vmatpush1.msra.mxu0 0.0
        %363 = vmatprep.subr.mxu0 0.0
        %364 = vmatpush1.msra.mxu0 0.0
        %365 = vmatprep.subr.mxu0 0.0
        %366 = vmatpush1.msra.mxu0 0.0
        %367 = vmatprep.subr.mxu0 0.0
        %368 = vmatpush1.msra.mxu0 0.0
        %369 = vmatprep.subr.mxu0 0.0
        %370 = vmatpush1.msra.mxu0 0.0
        %371 = vmatprep.subr.mxu0 0.0
        %372 = vmatpush1.msra.mxu0 0.0
        %373 = vmatprep.subr.mxu0 0.0
        %374 = vmatpush1.msra.mxu0 0.0
        %375 = vmatprep.mubr.f32.mxu0 0.0
        %376 = vmatmul.mubr.f32.gmra.mrb[0].mxu0 %v300
        %v377 = vpop.f32.mrb[0].mxu0
        %v378 = vadd.f32 %v281, %v377
        %v379 = vpop.f32.mrb[0].mxu0
        %v380 = vadd.f32 %v285, %v379
        %381 = vmatprep.mubr.f32.mxu0 0.0
        %382 = vmatmul.mubr.f32.gmra.mrb[0].mxu0 %v303
        %v383 = vpop.f32.mrb[0].mxu0
        %v384 = vadd.f32 %v281, %v383
        %v385 = vpop.f32.mrb[0].mxu0
        %v386 = vadd.f32 %v285, %v385
        %387 = vmatprep.mubr.f32.mxu0 0.0
        %388 = vmatmul.mubr.f32.gmra.mrb[0].mxu0 %v306
        %v389 = vpop.f32.mrb[0].mxu0
        %v390 = vadd.f32 %v281, %v389
        %v391 = vpop.f32.mrb[0].mxu0
        %v392 = vadd.f32 %v285, %v391
        %393 = vmatprep.mubr.f32.mxu0 0.0
        %394 = vmatmul.mubr.f32.gmra.mrb[0].mxu0 %v309
        %v395 = vpop.f32.mrb[0].mxu0
        %v396 = vadd.f32 %v281, %v395
        %v397 = vpop.f32.mrb[0].mxu0
        %v398 = vadd.f32 %v285, %v397
        %399 = vdwg.mxu0
        %400 = vmatprep.subr.mxu0 %v247
        %401 = vmatpush1.msra.mxu0 %v246
        %402 = vmatprep.subr.mxu0 %v251
        %403 = vmatpush1.msra.mxu0 %v250
        %404 = vmatprep.subr.mxu0 %v255
        %405 = vmatpush1.msra.mxu0 %v254
        %406 = vmatprep.subr.mxu0 %v259
        %407 = vmatpush1.msra.mxu0 %v258
        %408 = vmatprep.subr.mxu0 %v263
        %409 = vmatpush1.msra.mxu0 %v262
        %410 = vmatprep.subr.mxu0 %v267
        %411 = vmatpush1.msra.mxu0 %v266
        %412 = vmatprep.subr.mxu0 %v271
        %413 = vmatpush1.msra.mxu0 %v270
        %414 = vmatprep.subr.mxu0 %v275
        %415 = vmatpush1.msra.mxu0 %v274
        %416 = vmatprep.subr.mxu0 0.0
        %417 = vmatpush1.msra.mxu0 0.0
        %418 = vmatprep.subr.mxu0 0.0
        %419 = vmatpush1.msra.mxu0 0.0
        %420 = vmatprep.subr.mxu0 0.0
        %421 = vmatpush1.msra.mxu0 0.0
        %422 = vmatprep.subr.mxu0 0.0
        %423 = vmatpush1.msra.mxu0 0.0
        %424 = vmatprep.subr.mxu0 0.0
        %425 = vmatpush1.msra.mxu0 0.0
        %426 = vmatprep.subr.mxu0 0.0
        %427 = vmatpush1.msra.mxu0 0.0
        %428 = vmatprep.subr.mxu0 0.0
        %429 = vmatpush1.msra.mxu0 0.0
        %430 = vmatprep.subr.mxu0 0.0
        %431 = vmatpush1.msra.mxu0 0.0
        %432 = vmatprep.subr.mxu0 0.0
        %433 = vmatpush1.msra.mxu0 0.0
        %434 = vmatprep.subr.mxu0 0.0
        %435 = vmatpush1.msra.mxu0 0.0
        %436 = vmatprep.subr.mxu0 0.0
        %437 = vmatpush1.msra.mxu0 0.0
        %438 = vmatprep.subr.mxu0 0.0
        %439 = vmatpush1.msra.mxu0 0.0
        %440 = vmatprep.subr.mxu0 0.0
        %441 = vmatpush1.msra.mxu0 0.0
        %442 = vmatprep.subr.mxu0 0.0
        %443 = vmatpush1.msra.mxu0 0.0
        %444 = vmatprep.subr.mxu0 0.0
        %445 = vmatpush1.msra.mxu0 0.0
        %446 = vmatprep.subr.mxu0 0.0
        %447 = vmatpush1.msra.mxu0 0.0
        %448 = vmatprep.subr.mxu0 0.0
        %449 = vmatpush1.msra.mxu0 0.0
        %450 = vmatprep.subr.mxu0 0.0
        %451 = vmatpush1.msra.mxu0 0.0
        %452 = vmatprep.subr.mxu0 0.0
        %453 = vmatpush1.msra.mxu0 0.0
        %454 = vmatprep.subr.mxu0 0.0
        %455 = vmatpush1.msra.mxu0 0.0
        %456 = vmatprep.subr.mxu0 0.0
        %457 = vmatpush1.msra.mxu0 0.0
        %458 = vmatprep.subr.mxu0 0.0
        %459 = vmatpush1.msra.mxu0 0.0
        %460 = vmatprep.subr.mxu0 0.0
        %461 = vmatpush1.msra.mxu0 0.0
        %462 = vmatprep.subr.mxu0 0.0
        %463 = vmatpush1.msra.mxu0 0.0
        %464 = vmatprep.mubr.f32.mxu0 0.0
        %465 = vmatmul.mubr.f32.gmra.mrb[0].mxu0 %v300
        %v466 = vpop.f32.mrb[0].mxu0
        %v467 = vadd.f32 %v289, %v466
        %v468 = vpop.f32.mrb[0].mxu0
        %v469 = vadd.f32 %v293, %v468
        %470 = vmatprep.mubr.f32.mxu0 0.0
        %471 = vmatmul.mubr.f32.gmra.mrb[0].mxu0 %v303
        %v472 = vpop.f32.mrb[0].mxu0
        %v473 = vadd.f32 %v289, %v472
        %v474 = vpop.f32.mrb[0].mxu0
        %v475 = vadd.f32 %v293, %v474
        %476 = vmatprep.mubr.f32.mxu0 0.0
        %477 = vmatmul.mubr.f32.gmra.mrb[0].mxu0 %v306
        %v478 = vpop.f32.mrb[0].mxu0
        %v479 = vadd.f32 %v289, %v478
        %v480 = vpop.f32.mrb[0].mxu0
        %v481 = vadd.f32 %v293, %v480
        %482 = vmatprep.mubr.f32.mxu0 0.0
        %483 = vmatmul.mubr.f32.gmra.mrb[0].mxu0 %v309
        %v484 = vpop.f32.mrb[0].mxu0
        %v485 = vadd.f32 %v289, %v484
        %v486 = vpop.f32.mrb[0].mxu0
        %v487 = vadd.f32 %v293, %v486
        %488 = vdwg.mxu0
        %489 = vst [vmem:[#allocation4] sm:$0xff] %v378
        %490 = vst [vmem:[#allocation4 + $0x8] sm:$0xff] %v380
        %491 = vst [vmem:[#allocation4 + $0x10] sm:$0xff] %v467
        %492 = vst [vmem:[#allocation4 + $0x18] sm:$0xff] %v469
        %493 = vst [vmem:[#allocation4 + $0x20] sm:$0xff] %v384
        %494 = vst [vmem:[#allocation4 + $0x28] sm:$0xff] %v386
        %495 = vst [vmem:[#allocation4 + $0x30] sm:$0xff] %v473
        %496 = vst [vmem:[#allocation4 + $0x38] sm:$0xff] %v475
        %497 = vst [vmem:[#allocation4 + $0x40] sm:$0xff] %v390
        %498 = vst [vmem:[#allocation4 + $0x48] sm:$0xff] %v392
        %499 = vst [vmem:[#allocation4 + $0x50] sm:$0xff] %v479
        %500 = vst [vmem:[#allocation4 + $0x58] sm:$0xff] %v481
        %501 = vst [vmem:[#allocation4 + $0x60] sm:$0xff] %v396
        %502 = vst [vmem:[#allocation4 + $0x68] sm:$0xff] %v398
        %503 = vst [vmem:[#allocation4 + $0x70] sm:$0xff] %v485
        %504 = vst [vmem:[#allocation4 + $0x78] sm:$0xff] %v487
        %v505 = vld [vmem:[#allocation10] sm:$0xff]
        %v506 = vld [vmem:[#allocation10 + $0x8] sm:$0xff]
        %v507 = vld [vmem:[#allocation10 + $0x10] sm:$0xff]
        %v508 = vld [vmem:[#allocation10 + $0x18] sm:$0xff]
        %v509 = vld [vmem:[#allocation10 + $0x20] sm:$0xff]
        %v510 = vld [vmem:[#allocation10 + $0x28] sm:$0xff]
        %v511 = vld [vmem:[#allocation10 + $0x30] sm:$0xff]
        %v512 = vld [vmem:[#allocation10 + $0x38] sm:$0xff]
        %v513 = vld [vmem:[#allocation10 + $0x40] sm:$0xff]
        %v514 = vld [vmem:[#allocation10 + $0x48] sm:$0xff]
        %v515 = vld [vmem:[#allocation10 + $0x50] sm:$0xff]
        %v516 = vld [vmem:[#allocation10 + $0x58] sm:$0xff]
        %v517 = vld [vmem:[#allocation10 + $0x60] sm:$0xff]
        %v518 = vld [vmem:[#allocation10 + $0x68] sm:$0xff]
        %v519 = vld [vmem:[#allocation10 + $0x70] sm:$0xff]
        %v520 = vld [vmem:[#allocation10 + $0x78] sm:$0xff]
        %v521 = vld [vmem:[#allocation10 + $0x80] sm:$0xff]
        %v522 = vld [vmem:[#allocation10 + $0x88] sm:$0xff]
        %v523 = vld [vmem:[#allocation10 + $0x90] sm:$0xff]
        %v524 = vld [vmem:[#allocation10 + $0x98] sm:$0xff]
        %v525 = vld [vmem:[#allocation10 + $0xa0] sm:$0xff]
        %v526 = vld [vmem:[#allocation10 + $0xa8] sm:$0xff]
        %v527 = vld [vmem:[#allocation10 + $0xb0] sm:$0xff]
        %v528 = vld [vmem:[#allocation10 + $0xb8] sm:$0xff]
        %v529 = vld [vmem:[#allocation10 + $0xc0] sm:$0xff]
        %v530 = vld [vmem:[#allocation10 + $0xc8] sm:$0xff]
        %v531 = vld [vmem:[#allocation10 + $0xd0] sm:$0xff]
        %v532 = vld [vmem:[#allocation10 + $0xd8] sm:$0xff]
        %v533 = vld [vmem:[#allocation10 + $0xe0] sm:$0xff]
        %v534 = vld [vmem:[#allocation10 + $0xe8] sm:$0xff]
        %v535 = vld [vmem:[#allocation10 + $0xf0] sm:$0xff]
        %v536 = vld [vmem:[#allocation10 + $0xf8] sm:$0xff]
        %v537 = vld [vmem:[#allocation10 + $0x100] sm:$0xff]
        %v538 = vld [vmem:[#allocation10 + $0x108] sm:$0xff]
        %v539 = vld [vmem:[#allocation10 + $0x110] sm:$0xff]
        %v540 = vld [vmem:[#allocation10 + $0x118] sm:$0xff]
        %v541 = vld [vmem:[#allocation10 + $0x120] sm:$0xff]
        %v542 = vld [vmem:[#allocation10 + $0x128] sm:$0xff]
        %v543 = vld [vmem:[#allocation10 + $0x130] sm:$0xff]
        %v544 = vld [vmem:[#allocation10 + $0x138] sm:$0xff]
        %v545 = vld [vmem:[#allocation10 + $0x140] sm:$0xff]
        %v546 = vld [vmem:[#allocation10 + $0x148] sm:$0xff]
        %v547 = vld [vmem:[#allocation10 + $0x150] sm:$0xff]
        %v548 = vld [vmem:[#allocation10 + $0x158] sm:$0xff]
        %v549 = vld [vmem:[#allocation10 + $0x160] sm:$0xff]
        %v550 = vld [vmem:[#allocation10 + $0x168] sm:$0xff]
        %v551 = vld [vmem:[#allocation10 + $0x170] sm:$0xff]
        %v552 = vld [vmem:[#allocation10 + $0x178] sm:$0xff]
        %v553 = vld [vmem:[#allocation10 + $0x180] sm:$0xff]
        %v554 = vld [vmem:[#allocation10 + $0x188] sm:$0xff]
        %v555 = vld [vmem:[#allocation10 + $0x190] sm:$0xff]
        %v556 = vld [vmem:[#allocation10 + $0x198] sm:$0xff]
        %v557 = vld [vmem:[#allocation10 + $0x1a0] sm:$0xff]
        %v558 = vld [vmem:[#allocation10 + $0x1a8] sm:$0xff]
        %v559 = vld [vmem:[#allocation10 + $0x1b0] sm:$0xff]
        %v560 = vld [vmem:[#allocation10 + $0x1b8] sm:$0xff]
        %v561 = vld [vmem:[#allocation10 + $0x1c0] sm:$0xff]
        %v562 = vld [vmem:[#allocation10 + $0x1c8] sm:$0xff]
        %v563 = vld [vmem:[#allocation10 + $0x1d0] sm:$0xff]
        %v564 = vld [vmem:[#allocation10 + $0x1d8] sm:$0xff]
        %v565 = vld [vmem:[#allocation10 + $0x1e0] sm:$0xff]
        %v566 = vld [vmem:[#allocation10 + $0x1e8] sm:$0xff]
        %v567 = vld [vmem:[#allocation10 + $0x1f0] sm:$0xff]
        %v568 = vld [vmem:[#allocation10 + $0x1f8] sm:$0xff]
        %v569 = vld [vmem:[#allocation2] sm:$0xff]
        %v570 = vld [vmem:[#allocation3] sm:$0xff]
        %v571 = vld [vmem:[#allocation4] sm:$0xff]
        %v572 = vld [vmem:[#allocation4 + $0x8] sm:$0xff]
        %v573 = vld [vmem:[#allocation4 + $0x10] sm:$0xff]
        %v574 = vld [vmem:[#allocation4 + $0x18] sm:$0xff]
        %575 = vmatprep.subr.mxu0 %v506
        %576 = vmatpush1.msra.mxu0 %v505
        %577 = vmatprep.subr.mxu0 %v510
        %578 = vmatpush1.msra.mxu0 %v509
        %579 = vmatprep.subr.mxu0 %v514
        %580 = vmatpush1.msra.mxu0 %v513
        %581 = vmatprep.subr.mxu0 %v518
        %582 = vmatpush1.msra.mxu0 %v517
        %583 = vmatprep.subr.mxu0 %v522
        %584 = vmatpush1.msra.mxu0 %v521
        %585 = vmatprep.subr.mxu0 %v526
        %586 = vmatpush1.msra.mxu0 %v525
        %587 = vmatprep.subr.mxu0 %v530
        %588 = vmatpush1.msra.mxu0 %v529
        %589 = vmatprep.subr.mxu0 %v534
        %590 = vmatpush1.msra.mxu0 %v533
        %591 = vmatprep.subr.mxu0 %v538
        %592 = vmatpush1.msra.mxu0 %v537
        %593 = vmatprep.subr.mxu0 %v542
        %594 = vmatpush1.msra.mxu0 %v541
        %595 = vmatprep.subr.mxu0 %v546
        %596 = vmatpush1.msra.mxu0 %v545
        %597 = vmatprep.subr.mxu0 %v550
        %598 = vmatpush1.msra.mxu0 %v549
        %599 = vmatprep.subr.mxu0 %v554
        %600 = vmatpush1.msra.mxu0 %v553
        %601 = vmatprep.subr.mxu0 %v558
        %602 = vmatpush1.msra.mxu0 %v557
        %603 = vmatprep.subr.mxu0 %v562
        %604 = vmatpush1.msra.mxu0 %v561
        %605 = vmatprep.subr.mxu0 %v566
        %606 = vmatpush1.msra.mxu0 %v565
        %607 = vmatprep.subr.mxu0 0.0
        %608 = vmatpush1.msra.mxu0 0.0
        %609 = vmatprep.subr.mxu0 0.0
        %610 = vmatpush1.msra.mxu0 0.0
        %611 = vmatprep.subr.mxu0 0.0
        %612 = vmatpush1.msra.mxu0 0.0
        %613 = vmatprep.subr.mxu0 0.0
        %614 = vmatpush1.msra.mxu0 0.0
        %615 = vmatprep.subr.mxu0 0.0
        %616 = vmatpush1.msra.mxu0 0.0
        %617 = vmatprep.subr.mxu0 0.0
        %618 = vmatpush1.msra.mxu0 0.0
        %619 = vmatprep.subr.mxu0 0.0
        %620 = vmatpush1.msra.mxu0 0.0
        %621 = vmatprep.subr.mxu0 0.0
        %622 = vmatpush1.msra.mxu0 0.0
        %623 = vmatprep.subr.mxu0 0.0
        %624 = vmatpush1.msra.mxu0 0.0
        %625 = vmatprep.subr.mxu0 0.0
        %626 = vmatpush1.msra.mxu0 0.0
        %627 = vmatprep.subr.mxu0 0.0
        %628 = vmatpush1.msra.mxu0 0.0
        %629 = vmatprep.subr.mxu0 0.0
        %630 = vmatpush1.msra.mxu0 0.0
        %631 = vmatprep.subr.mxu0 0.0
        %632 = vmatpush1.msra.mxu0 0.0
        %633 = vmatprep.subr.mxu0 0.0
        %634 = vmatpush1.msra.mxu0 0.0
        %635 = vmatprep.subr.mxu0 0.0
        %636 = vmatpush1.msra.mxu0 0.0
        %637 = vmatprep.subr.mxu0 0.0
        %638 = vmatpush1.msra.mxu0 0.0
        %639 = vmatprep.mubr.f32.mxu0 0.0
        %640 = vmatmul.mubr.f32.gmra.mrb[0].mxu0 %v569
        %v641 = vpop.f32.mrb[0].mxu0
        %v642 = vadd.f32 0.0, %v641
        %v643 = vpop.f32.mrb[0].mxu0
        %v644 = vadd.f32 0.0, %v643
        %645 = vdwg.mxu0
        %646 = vmatprep.subr.mxu0 %v508
        %647 = vmatpush1.msra.mxu0 %v507
        %648 = vmatprep.subr.mxu0 %v512
        %649 = vmatpush1.msra.mxu0 %v511
        %650 = vmatprep.subr.mxu0 %v516
        %651 = vmatpush1.msra.mxu0 %v515
        %652 = vmatprep.subr.mxu0 %v520
        %653 = vmatpush1.msra.mxu0 %v519
        %654 = vmatprep.subr.mxu0 %v524
        %655 = vmatpush1.msra.mxu0 %v523
        %656 = vmatprep.subr.mxu0 %v528
        %657 = vmatpush1.msra.mxu0 %v527
        %658 = vmatprep.subr.mxu0 %v532
        %659 = vmatpush1.msra.mxu0 %v531
        %660 = vmatprep.subr.mxu0 %v536
        %661 = vmatpush1.msra.mxu0 %v535
        %662 = vmatprep.subr.mxu0 %v540
        %663 = vmatpush1.msra.mxu0 %v539
        %664 = vmatprep.subr.mxu0 %v544
        %665 = vmatpush1.msra.mxu0 %v543
        %666 = vmatprep.subr.mxu0 %v548
        %667 = vmatpush1.msra.mxu0 %v547
        %668 = vmatprep.subr.mxu0 %v552
        %669 = vmatpush1.msra.mxu0 %v551
        %670 = vmatprep.subr.mxu0 %v556
        %671 = vmatpush1.msra.mxu0 %v555
        %672 = vmatprep.subr.mxu0 %v560
        %673 = vmatpush1.msra.mxu0 %v559
        %674 = vmatprep.subr.mxu0 %v564
        %675 = vmatpush1.msra.mxu0 %v563
        %676 = vmatprep.subr.mxu0 %v568
        %677 = vmatpush1.msra.mxu0 %v567
        %678 = vmatprep.subr.mxu0 0.0
        %679 = vmatpush1.msra.mxu0 0.0
        %680 = vmatprep.subr.mxu0 0.0
        %681 = vmatpush1.msra.mxu0 0.0
        %682 = vmatprep.subr.mxu0 0.0
        %683 = vmatpush1.msra.mxu0 0.0
        %684 = vmatprep.subr.mxu0 0.0
        %685 = vmatpush1.msra.mxu0 0.0
        %686 = vmatprep.subr.mxu0 0.0
        %687 = vmatpush1.msra.mxu0 0.0
        %688 = vmatprep.subr.mxu0 0.0
        %689 = vmatpush1.msra.mxu0 0.0
        %690 = vmatprep.subr.mxu0 0.0
        %691 = vmatpush1.msra.mxu0 0.0
        %692 = vmatprep.subr.mxu0 0.0
        %693 = vmatpush1.msra.mxu0 0.0
        %694 = vmatprep.subr.mxu0 0.0
        %695 = vmatpush1.msra.mxu0 0.0
        %696 = vmatprep.subr.mxu0 0.0
        %697 = vmatpush1.msra.mxu0 0.0
        %698 = vmatprep.subr.mxu0 0.0
        %699 = vmatpush1.msra.mxu0 0.0
        %700 = vmatprep.subr.mxu0 0.0
        %701 = vmatpush1.msra.mxu0 0.0
        %702 = vmatprep.subr.mxu0 0.0
        %703 = vmatpush1.msra.mxu0 0.0
        %704 = vmatprep.subr.mxu0 0.0
        %705 = vmatpush1.msra.mxu0 0.0
        %706 = vmatprep.subr.mxu0 0.0
        %707 = vmatpush1.msra.mxu0 0.0
        %708 = vmatprep.subr.mxu0 0.0
        %709 = vmatpush1.msra.mxu0 0.0
        %710 = vmatprep.mubr.f32.mxu0 0.0
        %711 = vmatmul.mubr.f32.gmra.mrb[0].mxu0 %v569
        %v712 = vpop.f32.mrb[0].mxu0
        %v713 = vadd.f32 0.0, %v712
        %v714 = vpop.f32.mrb[0].mxu0
        %v715 = vadd.f32 0.0, %v714
        %716 = vdwg.mxu0
        %v717 = vadd.f32 %v571, %v642
        %v718 = vadd.f32 %v572, %v644
        %v719 = vadd.f32 %v573, %v713
        %v720 = vadd.f32 %v574, %v715
        %v721 = vmul.f32 %v717, 0.5
        %v722 = vtanh.pop %v721
        %v723 = vmul.f32 %v722, 0.5
        %v724 = vadd.f32 %v723, 0.5
        %v725 = vmul.f32 %v718, 0.5
        %v726 = vtanh.pop %v725
        %v727 = vmul.f32 %v726, 0.5
        %v728 = vadd.f32 %v727, 0.5
        %v729 = vtanh.pop %v719
        %v730 = vmul.f32 %v720, 0.5
        %v731 = vtanh.pop %v730
        %v732 = vmul.f32 %v731, 0.5
        %v733 = vadd.f32 %v732, 0.5
        %v734 = vmul.f32 %v728, %v570
        %v735 = vmul.f32 %v724, %v729
        %v736 = vadd.f32 %v734, %v735
        %v737 = vtanh.pop %v736
        %v738 = vmul.f32 %v733, %v737
        %s739 = scalar_lea.vmem [#allocation4], 32
        %v740 = vld [vmem:[%s739] sm:$0xff]
        %v741 = vld [vmem:[%s739 + $0x8] sm:$0xff]
        %v742 = vld [vmem:[%s739 + $0x10] sm:$0xff]
        %v743 = vld [vmem:[%s739 + $0x18] sm:$0xff]
        %744 = vmatprep.subr.mxu0 %v506
        %745 = vmatpush1.msra.mxu0 %v505
        %746 = vmatprep.subr.mxu0 %v510
        %747 = vmatpush1.msra.mxu0 %v509
        %748 = vmatprep.subr.mxu0 %v514
        %749 = vmatpush1.msra.mxu0 %v513
        %750 = vmatprep.subr.mxu0 %v518
        %751 = vmatpush1.msra.mxu0 %v517
        %752 = vmatprep.subr.mxu0 %v522
        %753 = vmatpush1.msra.mxu0 %v521
        %754 = vmatprep.subr.mxu0 %v526
        %755 = vmatpush1.msra.mxu0 %v525
        %756 = vmatprep.subr.mxu0 %v530
        %757 = vmatpush1.msra.mxu0 %v529
        %758 = vmatprep.subr.mxu0 %v534
        %759 = vmatpush1.msra.mxu0 %v533
        %760 = vmatprep.subr.mxu0 %v538
        %761 = vmatpush1.msra.mxu0 %v537
        %762 = vmatprep.subr.mxu0 %v542
        %763 = vmatpush1.msra.mxu0 %v541
        %764 = vmatprep.subr.mxu0 %v546
        %765 = vmatpush1.msra.mxu0 %v545
        %766 = vmatprep.subr.mxu0 %v550
        %767 = vmatpush1.msra.mxu0 %v549
        %768 = vmatprep.subr.mxu0 %v554
        %769 = vmatpush1.msra.mxu0 %v553
        %770 = vmatprep.subr.mxu0 %v558
        %771 = vmatpush1.msra.mxu0 %v557
        %772 = vmatprep.subr.mxu0 %v562
        %773 = vmatpush1.msra.mxu0 %v561
        %774 = vmatprep.subr.mxu0 %v566
        %775 = vmatpush1.msra.mxu0 %v565
        %776 = vmatprep.subr.mxu0 0.0
        %777 = vmatpush1.msra.mxu0 0.0
        %778 = vmatprep.subr.mxu0 0.0
        %779 = vmatpush1.msra.mxu0 0.0
        %780 = vmatprep.subr.mxu0 0.0
        %781 = vmatpush1.msra.mxu0 0.0
        %782 = vmatprep.subr.mxu0 0.0
        %783 = vmatpush1.msra.mxu0 0.0
        %784 = vmatprep.subr.mxu0 0.0
        %785 = vmatpush1.msra.mxu0 0.0
        %786 = vmatprep.subr.mxu0 0.0
        %787 = vmatpush1.msra.mxu0 0.0
        %788 = vmatprep.subr.mxu0 0.0
        %789 = vmatpush1.msra.mxu0 0.0
        %790 = vmatprep.subr.mxu0 0.0
        %791 = vmatpush1.msra.mxu0 0.0
        %792 = vmatprep.subr.mxu0 0.0
        %793 = vmatpush1.msra.mxu0 0.0
        %794 = vmatprep.subr.mxu0 0.0
        %795 = vmatpush1.msra.mxu0 0.0
        %796 = vmatprep.subr.mxu0 0.0
        %797 = vmatpush1.msra.mxu0 0.0
        %798 = vmatprep.subr.mxu0 0.0
        %799 = vmatpush1.msra.mxu0 0.0
        %800 = vmatprep.subr.mxu0 0.0
        %801 = vmatpush1.msra.mxu0 0.0
        %802 = vmatprep.subr.mxu0 0.0
        %803 = vmatpush1.msra.mxu0 0.0
        %804 = vmatprep.subr.mxu0 0.0
        %805 = vmatpush1.msra.mxu0 0.0
        %806 = vmatprep.subr.mxu0 0.0
        %807 = vmatpush1.msra.mxu0 0.0
        %808 = vmatprep.mubr.f32.mxu0 0.0
        %809 = vmatmul.mubr.f32.gmra.mrb[0].mxu0 %v738
        %v810 = vpop.f32.mrb[0].mxu0
        %v811 = vadd.f32 0.0, %v810
        %v812 = vpop.f32.mrb[0].mxu0
        %v813 = vadd.f32 0.0, %v812
        %814 = vdwg.mxu0
        %815 = vmatprep.subr.mxu0 %v508
        %816 = vmatpush1.msra.mxu0 %v507
        %817 = vmatprep.subr.mxu0 %v512
        %818 = vmatpush1.msra.mxu0 %v511
        %819 = vmatprep.subr.mxu0 %v516
        %820 = vmatpush1.msra.mxu0 %v515
        %821 = vmatprep.subr.mxu0 %v520
        %822 = vmatpush1.msra.mxu0 %v519
        %823 = vmatprep.subr.mxu0 %v524
        %824 = vmatpush1.msra.mxu0 %v523
        %825 = vmatprep.subr.mxu0 %v528
        %826 = vmatpush1.msra.mxu0 %v527
        %827 = vmatprep.subr.mxu0 %v532
        %828 = vmatpush1.msra.mxu0 %v531
        %829 = vmatprep.subr.mxu0 %v536
        %830 = vmatpush1.msra.mxu0 %v535
        %831 = vmatprep.subr.mxu0 %v540
        %832 = vmatpush1.msra.mxu0 %v539
        %833 = vmatprep.subr.mxu0 %v544
        %834 = vmatpush1.msra.mxu0 %v543
        %835 = vmatprep.subr.mxu0 %v548
        %836 = vmatpush1.msra.mxu0 %v547
        %837 = vmatprep.subr.mxu0 %v552
        %838 = vmatpush1.msra.mxu0 %v551
        %839 = vmatprep.subr.mxu0 %v556
        %840 = vmatpush1.msra.mxu0 %v555
        %841 = vmatprep.subr.mxu0 %v560
        %842 = vmatpush1.msra.mxu0 %v559
        %843 = vmatprep.subr.mxu0 %v564
        %844 = vmatpush1.msra.mxu0 %v563
        %845 = vmatprep.subr.mxu0 %v568
        %846 = vmatpush1.msra.mxu0 %v567
        %847 = vmatprep.subr.mxu0 0.0
        %848 = vmatpush1.msra.mxu0 0.0
        %849 = vmatprep.subr.mxu0 0.0
        %850 = vmatpush1.msra.mxu0 0.0
        %851 = vmatprep.subr.mxu0 0.0
        %852 = vmatpush1.msra.mxu0 0.0
        %853 = vmatprep.subr.mxu0 0.0
        %854 = vmatpush1.msra.mxu0 0.0
        %855 = vmatprep.subr.mxu0 0.0
        %856 = vmatpush1.msra.mxu0 0.0
        %857 = vmatprep.subr.mxu0 0.0
        %858 = vmatpush1.msra.mxu0 0.0
        %859 = vmatprep.subr.mxu0 0.0
        %860 = vmatpush1.msra.mxu0 0.0
        %861 = vmatprep.subr.mxu0 0.0
        %862 = vmatpush1.msra.mxu0 0.0
        %863 = vmatprep.subr.mxu0 0.0
        %864 = vmatpush1.msra.mxu0 0.0
        %865 = vmatprep.subr.mxu0 0.0
        %866 = vmatpush1.msra.mxu0 0.0
        %867 = vmatprep.subr.mxu0 0.0
        %868 = vmatpush1.msra.mxu0 0.0
        %869 = vmatprep.subr.mxu0 0.0
        %870 = vmatpush1.msra.mxu0 0.0
        %871 = vmatprep.subr.mxu0 0.0
        %872 = vmatpush1.msra.mxu0 0.0
        %873 = vmatprep.subr.mxu0 0.0
        %874 = vmatpush1.msra.mxu0 0.0
        %875 = vmatprep.subr.mxu0 0.0
        %876 = vmatpush1.msra.mxu0 0.0
        %877 = vmatprep.subr.mxu0 0.0
        %878 = vmatpush1.msra.mxu0 0.0
        %879 = vmatprep.mubr.f32.mxu0 0.0
        %880 = vmatmul.mubr.f32.gmra.mrb[0].mxu0 %v738
        %v881 = vpop.f32.mrb[0].mxu0
        %v882 = vadd.f32 0.0, %v881
        %v883 = vpop.f32.mrb[0].mxu0
        %v884 = vadd.f32 0.0, %v883
        %885 = vdwg.mxu0
        %v886 = vadd.f32 %v740, %v811
        %v887 = vadd.f32 %v741, %v813
        %v888 = vadd.f32 %v742, %v882
        %v889 = vadd.f32 %v743, %v884
        %v890 = vmul.f32 %v886, 0.5
        %v891 = vtanh.pop %v890
        %v892 = vmul.f32 %v891, 0.5
        %v893 = vadd.f32 %v892, 0.5
        %v894 = vmul.f32 %v887, 0.5
        %v895 = vtanh.pop %v894
        %v896 = vmul.f32 %v895, 0.5
        %v897 = vadd.f32 %v896, 0.5
        %v898 = vtanh.pop %v888
        %v899 = vmul.f32 %v889, 0.5
        %v900 = vtanh.pop %v899
        %v901 = vmul.f32 %v900, 0.5
        %v902 = vadd.f32 %v901, 0.5
        %v903 = vmul.f32 %v897, %v736
        %v904 = vmul.f32 %v893, %v898
        %v905 = vadd.f32 %v903, %v904
        %v906 = vtanh.pop %v905
        %v907 = vmul.f32 %v902, %v906
        %s908 = scalar_lea.vmem [#allocation4], 64
        %v909 = vld [vmem:[%s908] sm:$0xff]
        %v910 = vld [vmem:[%s908 + $0x8] sm:$0xff]
        %v911 = vld [vmem:[%s908 + $0x10] sm:$0xff]
        %v912 = vld [vmem:[%s908 + $0x18] sm:$0xff]
        %913 = vmatprep.subr.mxu0 %v506
        %914 = vmatpush1.msra.mxu0 %v505
        %915 = vmatprep.subr.mxu0 %v510
        %916 = vmatpush1.msra.mxu0 %v509
        %917 = vmatprep.subr.mxu0 %v514
        %918 = vmatpush1.msra.mxu0 %v513
        %919 = vmatprep.subr.mxu0 %v518
        %920 = vmatpush1.msra.mxu0 %v517
        %921 = vmatprep.subr.mxu0 %v522
        %922 = vmatpush1.msra.mxu0 %v521
        %923 = vmatprep.subr.mxu0 %v526
        %924 = vmatpush1.msra.mxu0 %v525
        %925 = vmatprep.subr.mxu0 %v530
        %926 = vmatpush1.msra.mxu0 %v529
        %927 = vmatprep.subr.mxu0 %v534
        %928 = vmatpush1.msra.mxu0 %v533
        %929 = vmatprep.subr.mxu0 %v538
        %930 = vmatpush1.msra.mxu0 %v537
        %931 = vmatprep.subr.mxu0 %v542
        %932 = vmatpush1.msra.mxu0 %v541
        %933 = vmatprep.subr.mxu0 %v546
        %934 = vmatpush1.msra.mxu0 %v545
        %935 = vmatprep.subr.mxu0 %v550
        %936 = vmatpush1.msra.mxu0 %v549
        %937 = vmatprep.subr.mxu0 %v554
        %938 = vmatpush1.msra.mxu0 %v553
        %939 = vmatprep.subr.mxu0 %v558
        %940 = vmatpush1.msra.mxu0 %v557
        %941 = vmatprep.subr.mxu0 %v562
        %942 = vmatpush1.msra.mxu0 %v561
        %943 = vmatprep.subr.mxu0 %v566
        %944 = vmatpush1.msra.mxu0 %v565
        %945 = vmatprep.subr.mxu0 0.0
        %946 = vmatpush1.msra.mxu0 0.0
        %947 = vmatprep.subr.mxu0 0.0
        %948 = vmatpush1.msra.mxu0 0.0
        %949 = vmatprep.subr.mxu0 0.0
        %950 = vmatpush1.msra.mxu0 0.0
        %951 = vmatprep.subr.mxu0 0.0
        %952 = vmatpush1.msra.mxu0 0.0
        %953 = vmatprep.subr.mxu0 0.0
        %954 = vmatpush1.msra.mxu0 0.0
        %955 = vmatprep.subr.mxu0 0.0
        %956 = vmatpush1.msra.mxu0 0.0
        %957 = vmatprep.subr.mxu0 0.0
        %958 = vmatpush1.msra.mxu0 0.0
        %959 = vmatprep.subr.mxu0 0.0
        %960 = vmatpush1.msra.mxu0 0.0
        %961 = vmatprep.subr.mxu0 0.0
        %962 = vmatpush1.msra.mxu0 0.0
        %963 = vmatprep.subr.mxu0 0.0
        %964 = vmatpush1.msra.mxu0 0.0
        %965 = vmatprep.subr.mxu0 0.0
        %966 = vmatpush1.msra.mxu0 0.0
        %967 = vmatprep.subr.mxu0 0.0
        %968 = vmatpush1.msra.mxu0 0.0
        %969 = vmatprep.subr.mxu0 0.0
        %970 = vmatpush1.msra.mxu0 0.0
        %971 = vmatprep.subr.mxu0 0.0
        %972 = vmatpush1.msra.mxu0 0.0
        %973 = vmatprep.subr.mxu0 0.0
        %974 = vmatpush1.msra.mxu0 0.0
        %975 = vmatprep.subr.mxu0 0.0
        %976 = vmatpush1.msra.mxu0 0.0
        %977 = vmatprep.mubr.f32.mxu0 0.0
        %978 = vmatmul.mubr.f32.gmra.mrb[0].mxu0 %v907
        %v979 = vpop.f32.mrb[0].mxu0
        %v980 = vadd.f32 0.0, %v979
        %v981 = vpop.f32.mrb[0].mxu0
        %v982 = vadd.f32 0.0, %v981
        %983 = vdwg.mxu0
        %984 = vmatprep.subr.mxu0 %v508
        %985 = vmatpush1.msra.mxu0 %v507
        %986 = vmatprep.subr.mxu0 %v512
        %987 = vmatpush1.msra.mxu0 %v511
        %988 = vmatprep.subr.mxu0 %v516
        %989 = vmatpush1.msra.mxu0 %v515
        %990 = vmatprep.subr.mxu0 %v520
        %991 = vmatpush1.msra.mxu0 %v519
        %992 = vmatprep.subr.mxu0 %v524
        %993 = vmatpush1.msra.mxu0 %v523
        %994 = vmatprep.subr.mxu0 %v528
        %995 = vmatpush1.msra.mxu0 %v527
        %996 = vmatprep.subr.mxu0 %v532
        %997 = vmatpush1.msra.mxu0 %v531
        %998 = vmatprep.subr.mxu0 %v536
        %999 = vmatpush1.msra.mxu0 %v535
        %1000 = vmatprep.subr.mxu0 %v540
        %1001 = vmatpush1.msra.mxu0 %v539
        %1002 = vmatprep.subr.mxu0 %v544
        %1003 = vmatpush1.msra.mxu0 %v543
        %1004 = vmatprep.subr.mxu0 %v548
        %1005 = vmatpush1.msra.mxu0 %v547
        %1006 = vmatprep.subr.mxu0 %v552
        %1007 = vmatpush1.msra.mxu0 %v551
        %1008 = vmatprep.subr.mxu0 %v556
        %1009 = vmatpush1.msra.mxu0 %v555
        %1010 = vmatprep.subr.mxu0 %v560
        %1011 = vmatpush1.msra.mxu0 %v559
        %1012 = vmatprep.subr.mxu0 %v564
        %1013 = vmatpush1.msra.mxu0 %v563
        %1014 = vmatprep.subr.mxu0 %v568
        %1015 = vmatpush1.msra.mxu0 %v567
        %1016 = vmatprep.subr.mxu0 0.0
        %1017 = vmatpush1.msra.mxu0 0.0
        %1018 = vmatprep.subr.mxu0 0.0
        %1019 = vmatpush1.msra.mxu0 0.0
        %1020 = vmatprep.subr.mxu0 0.0
        %1021 = vmatpush1.msra.mxu0 0.0
        %1022 = vmatprep.subr.mxu0 0.0
        %1023 = vmatpush1.msra.mxu0 0.0
        %1024 = vmatprep.subr.mxu0 0.0
        %1025 = vmatpush1.msra.mxu0 0.0
        %1026 = vmatprep.subr.mxu0 0.0
        %1027 = vmatpush1.msra.mxu0 0.0
        %1028 = vmatprep.subr.mxu0 0.0
        %1029 = vmatpush1.msra.mxu0 0.0
        %1030 = vmatprep.subr.mxu0 0.0
        %1031 = vmatpush1.msra.mxu0 0.0
        %1032 = vmatprep.subr.mxu0 0.0
        %1033 = vmatpush1.msra.mxu0 0.0
        %1034 = vmatprep.subr.mxu0 0.0
        %1035 = vmatpush1.msra.mxu0 0.0
        %1036 = vmatprep.subr.mxu0 0.0
        %1037 = vmatpush1.msra.mxu0 0.0
        %1038 = vmatprep.subr.mxu0 0.0
        %1039 = vmatpush1.msra.mxu0 0.0
        %1040 = vmatprep.subr.mxu0 0.0
        %1041 = vmatpush1.msra.mxu0 0.0
        %1042 = vmatprep.subr.mxu0 0.0
        %1043 = vmatpush1.msra.mxu0 0.0
        %1044 = vmatprep.subr.mxu0 0.0
        %1045 = vmatpush1.msra.mxu0 0.0
        %1046 = vmatprep.subr.mxu0 0.0
        %1047 = vmatpush1.msra.mxu0 0.0
        %1048 = vmatprep.mubr.f32.mxu0 0.0
        %1049 = vmatmul.mubr.f32.gmra.mrb[0].mxu0 %v907
        %v1050 = vpop.f32.mrb[0].mxu0
        %v1051 = vadd.f32 0.0, %v1050
        %v1052 = vpop.f32.mrb[0].mxu0
        %v1053 = vadd.f32 0.0, %v1052
        %1054 = vdwg.mxu0
        %v1055 = vadd.f32 %v909, %v980
        %v1056 = vadd.f32 %v910, %v982
        %v1057 = vadd.f32 %v911, %v1051
        %v1058 = vadd.f32 %v912, %v1053
        %v1059 = vmul.f32 %v1055, 0.5
        %v1060 = vtanh.pop %v1059
        %v1061 = vmul.f32 %v1060, 0.5
        %v1062 = vadd.f32 %v1061, 0.5
        %v1063 = vmul.f32 %v1056, 0.5
        %v1064 = vtanh.pop %v1063
        %v1065 = vmul.f32 %v1064, 0.5
        %v1066 = vadd.f32 %v1065, 0.5
        %v1067 = vtanh.pop %v1057
        %v1068 = vmul.f32 %v1058, 0.5
        %v1069 = vtanh.pop %v1068
        %v1070 = vmul.f32 %v1069, 0.5
        %v1071 = vadd.f32 %v1070, 0.5
        %v1072 = vmul.f32 %v1066, %v905
        %v1073 = vmul.f32 %v1062, %v1067
        %v1074 = vadd.f32 %v1072, %v1073
        %v1075 = vtanh.pop %v1074
        %v1076 = vmul.f32 %v1071, %v1075
        %s1077 = scalar_lea.vmem [#allocation4], 96
        %v1078 = vld [vmem:[%s1077] sm:$0xff]
        %v1079 = vld [vmem:[%s1077 + $0x8] sm:$0xff]
        %v1080 = vld [vmem:[%s1077 + $0x10] sm:$0xff]
        %v1081 = vld [vmem:[%s1077 + $0x18] sm:$0xff]
        %1082 = vmatprep.subr.mxu0 %v506
        %1083 = vmatpush1.msra.mxu0 %v505
        %1084 = vmatprep.subr.mxu0 %v510
        %1085 = vmatpush1.msra.mxu0 %v509
        %1086 = vmatprep.subr.mxu0 %v514
        %1087 = vmatpush1.msra.mxu0 %v513
        %1088 = vmatprep.subr.mxu0 %v518
        %1089 = vmatpush1.msra.mxu0 %v517
        %1090 = vmatprep.subr.mxu0 %v522
        %1091 = vmatpush1.msra.mxu0 %v521
        %1092 = vmatprep.subr.mxu0 %v526
        %1093 = vmatpush1.msra.mxu0 %v525
        %1094 = vmatprep.subr.mxu0 %v530
        %1095 = vmatpush1.msra.mxu0 %v529
        %1096 = vmatprep.subr.mxu0 %v534
        %1097 = vmatpush1.msra.mxu0 %v533
        %1098 = vmatprep.subr.mxu0 %v538
        %1099 = vmatpush1.msra.mxu0 %v537
        %1100 = vmatprep.subr.mxu0 %v542
        %1101 = vmatpush1.msra.mxu0 %v541
        %1102 = vmatprep.subr.mxu0 %v546
        %1103 = vmatpush1.msra.mxu0 %v545
        %1104 = vmatprep.subr.mxu0 %v550
        %1105 = vmatpush1.msra.mxu0 %v549
        %1106 = vmatprep.subr.mxu0 %v554
        %1107 = vmatpush1.msra.mxu0 %v553
        %1108 = vmatprep.subr.mxu0 %v558
        %1109 = vmatpush1.msra.mxu0 %v557
        %1110 = vmatprep.subr.mxu0 %v562
        %1111 = vmatpush1.msra.mxu0 %v561
        %1112 = vmatprep.subr.mxu0 %v566
        %1113 = vmatpush1.msra.mxu0 %v565
        %1114 = vmatprep.subr.mxu0 0.0
        %1115 = vmatpush1.msra.mxu0 0.0
        %1116 = vmatprep.subr.mxu0 0.0
        %1117 = vmatpush1.msra.mxu0 0.0
        %1118 = vmatprep.subr.mxu0 0.0
        %1119 = vmatpush1.msra.mxu0 0.0
        %1120 = vmatprep.subr.mxu0 0.0
        %1121 = vmatpush1.msra.mxu0 0.0
        %1122 = vmatprep.subr.mxu0 0.0
        %1123 = vmatpush1.msra.mxu0 0.0
        %1124 = vmatprep.subr.mxu0 0.0
        %1125 = vmatpush1.msra.mxu0 0.0
        %1126 = vmatprep.subr.mxu0 0.0
        %1127 = vmatpush1.msra.mxu0 0.0
        %1128 = vmatprep.subr.mxu0 0.0
        %1129 = vmatpush1.msra.mxu0 0.0
        %1130 = vmatprep.subr.mxu0 0.0
        %1131 = vmatpush1.msra.mxu0 0.0
        %1132 = vmatprep.subr.mxu0 0.0
        %1133 = vmatpush1.msra.mxu0 0.0
        %1134 = vmatprep.subr.mxu0 0.0
        %1135 = vmatpush1.msra.mxu0 0.0
        %1136 = vmatprep.subr.mxu0 0.0
        %1137 = vmatpush1.msra.mxu0 0.0
        %1138 = vmatprep.subr.mxu0 0.0
        %1139 = vmatpush1.msra.mxu0 0.0
        %1140 = vmatprep.subr.mxu0 0.0
        %1141 = vmatpush1.msra.mxu0 0.0
        %1142 = vmatprep.subr.mxu0 0.0
        %1143 = vmatpush1.msra.mxu0 0.0
        %1144 = vmatprep.subr.mxu0 0.0
        %1145 = vmatpush1.msra.mxu0 0.0
        %1146 = vmatprep.mubr.f32.mxu0 0.0
        %1147 = vmatmul.mubr.f32.gmra.mrb[0].mxu0 %v1076
        %v1148 = vpop.f32.mrb[0].mxu0
        %v1149 = vadd.f32 0.0, %v1148
        %v1150 = vpop.f32.mrb[0].mxu0
        %v1151 = vadd.f32 0.0, %v1150
        %1152 = vdwg.mxu0
        %1153 = vmatprep.subr.mxu0 %v508
        %1154 = vmatpush1.msra.mxu0 %v507
        %1155 = vmatprep.subr.mxu0 %v512
        %1156 = vmatpush1.msra.mxu0 %v511
        %1157 = vmatprep.subr.mxu0 %v516
        %1158 = vmatpush1.msra.mxu0 %v515
        %1159 = vmatprep.subr.mxu0 %v520
        %1160 = vmatpush1.msra.mxu0 %v519
        %1161 = vmatprep.subr.mxu0 %v524
        %1162 = vmatpush1.msra.mxu0 %v523
        %1163 = vmatprep.subr.mxu0 %v528
        %1164 = vmatpush1.msra.mxu0 %v527
        %1165 = vmatprep.subr.mxu0 %v532
        %1166 = vmatpush1.msra.mxu0 %v531
        %1167 = vmatprep.subr.mxu0 %v536
        %1168 = vmatpush1.msra.mxu0 %v535
        %1169 = vmatprep.subr.mxu0 %v540
        %1170 = vmatpush1.msra.mxu0 %v539
        %1171 = vmatprep.subr.mxu0 %v544
        %1172 = vmatpush1.msra.mxu0 %v543
        %1173 = vmatprep.subr.mxu0 %v548
        %1174 = vmatpush1.msra.mxu0 %v547
        %1175 = vmatprep.subr.mxu0 %v552
        %1176 = vmatpush1.msra.mxu0 %v551
        %1177 = vmatprep.subr.mxu0 %v556
        %1178 = vmatpush1.msra.mxu0 %v555
        %1179 = vmatprep.subr.mxu0 %v560
        %1180 = vmatpush1.msra.mxu0 %v559
        %1181 = vmatprep.subr.mxu0 %v564
        %1182 = vmatpush1.msra.mxu0 %v563
        %1183 = vmatprep.subr.mxu0 %v568
        %1184 = vmatpush1.msra.mxu0 %v567
        %1185 = vmatprep.subr.mxu0 0.0
        %1186 = vmatpush1.msra.mxu0 0.0
        %1187 = vmatprep.subr.mxu0 0.0
        %1188 = vmatpush1.msra.mxu0 0.0
        %1189 = vmatprep.subr.mxu0 0.0
        %1190 = vmatpush1.msra.mxu0 0.0
        %1191 = vmatprep.subr.mxu0 0.0
        %1192 = vmatpush1.msra.mxu0 0.0
        %1193 = vmatprep.subr.mxu0 0.0
        %1194 = vmatpush1.msra.mxu0 0.0
        %1195 = vmatprep.subr.mxu0 0.0
        %1196 = vmatpush1.msra.mxu0 0.0
        %1197 = vmatprep.subr.mxu0 0.0
        %1198 = vmatpush1.msra.mxu0 0.0
        %1199 = vmatprep.subr.mxu0 0.0
        %1200 = vmatpush1.msra.mxu0 0.0
        %1201 = vmatprep.subr.mxu0 0.0
        %1202 = vmatpush1.msra.mxu0 0.0
        %1203 = vmatprep.subr.mxu0 0.0
        %1204 = vmatpush1.msra.mxu0 0.0
        %1205 = vmatprep.subr.mxu0 0.0
        %1206 = vmatpush1.msra.mxu0 0.0
        %1207 = vmatprep.subr.mxu0 0.0
        %1208 = vmatpush1.msra.mxu0 0.0
        %1209 = vmatprep.subr.mxu0 0.0
        %1210 = vmatpush1.msra.mxu0 0.0
        %1211 = vmatprep.subr.mxu0 0.0
        %1212 = vmatpush1.msra.mxu0 0.0
        %1213 = vmatprep.subr.mxu0 0.0
        %1214 = vmatpush1.msra.mxu0 0.0
        %1215 = vmatprep.subr.mxu0 0.0
        %1216 = vmatpush1.msra.mxu0 0.0
        %1217 = vmatprep.mubr.f32.mxu0 0.0
        %1218 = vmatmul.mubr.f32.gmra.mrb[0].mxu0 %v1076
        %v1219 = vpop.f32.mrb[0].mxu0
        %v1220 = vadd.f32 0.0, %v1219
        %v1221 = vpop.f32.mrb[0].mxu0
        %v1222 = vadd.f32 0.0, %v1221
        %1223 = vdwg.mxu0
        %v1224 = vadd.f32 %v1078, %v1149
        %v1225 = vadd.f32 %v1079, %v1151
        %v1226 = vadd.f32 %v1080, %v1220
        %v1227 = vadd.f32 %v1081, %v1222
        %v1228 = vmul.f32 %v1224, 0.5
        %v1229 = vtanh.pop %v1228
        %v1230 = vmul.f32 %v1229, 0.5
        %v1231 = vadd.f32 %v1230, 0.5
        %v1232 = vmul.f32 %v1225, 0.5
        %v1233 = vtanh.pop %v1232
        %v1234 = vmul.f32 %v1233, 0.5
        %v1235 = vadd.f32 %v1234, 0.5
        %v1236 = vtanh.pop %v1226
        %v1237 = vmul.f32 %v1227, 0.5
        %v1238 = vtanh.pop %v1237
        %v1239 = vmul.f32 %v1238, 0.5
        %v1240 = vadd.f32 %v1239, 0.5
        %v1241 = vmul.f32 %v1235, %v1074
        %v1242 = vmul.f32 %v1231, %v1236
        %v1243 = vadd.f32 %v1241, %v1242
        %v1244 = vtanh.pop %v1243
        %v1245 = vmul.f32 %v1240, %v1244
        %1246 = vst [vmem:[#allocation2] sm:$0xff] %v1245
        %1247 = vst [vmem:[#allocation3] sm:$0xff] %v1243
        %p1248 = scmp.eq.s32.totalorder %s20, 1
        // Predicated region
        $region53: #{tpu_custom_call.1} parent=35 // pred_check
          %p1249 = pneg %p1248
        $region54: #{tpu_custom_call.1} parent=35 // pred_check_branch
          %1251 = sbr.rel (%p1249) target = $region56
        $region55: #{tpu_custom_call.1} parent=35 // pred_region
          %1252 = vst [vmem:[#allocation11] sm:$0xff] %v1245
        $region56: #{tpu_custom_call.1} parent=35 // pred_fallthru
          _
        // Predicated region
        $region57: #{tpu_custom_call.1} parent=35 // pred_check
          %p1253 = pneg %p122
        $region58: #{tpu_custom_call.1} parent=35 // pred_check_branch
          %1255 = sbr.rel (%p1253) target = $region60
        $region59: #{tpu_custom_call.1} parent=35 // pred_region
          %s1257 = ssub.s32 128, 128
          %1258 = vsyncadd [#allocation7], %s1257
          %s1260 = sshll.u32 [#allocation11], 4
          %s1261 = int_to_ptr.vmem [resolvable:$true] %s1260
          %1263 = dma.vmem_to_hbm [thread:$0]  %s1261, 128, %s4, [#allocation7]
        $region60: #{tpu_custom_call.1} parent=35 // pred_fallthru
          _
        // Predicated region
        $region61: #{tpu_custom_call.1} parent=35 // pred_check
          %p1264 = pneg %p122
        $region62: #{tpu_custom_call.1} parent=35 // pred_check_branch
          %1266 = sbr.rel (%p1264) target = $region64
        $region63: #{tpu_custom_call.1} parent=35 // pred_region
          %1267 = dma.done [#allocation7], 128
        $region64: #{tpu_custom_call.1} parent=35 // pred_fallthru
          _
      $region36: #{tpu_custom_call.1} parent=5 // pred_fallthru
        _
      %p1268 = scmp.le.s32.totalorder 2, %s15
      // Predicated region
      $region65: #{tpu_custom_call.1} parent=5 // pred_check
        %p1269 = pneg %p1268
      $region66: #{tpu_custom_call.1} parent=5 // pred_check_branch
        %1271 = sbr.rel (%p1269) target = $region68
      $region67: #{tpu_custom_call.1} parent=5 // pred_region
        %s1272 = ssub.s32 %s15, 2
      $region68: #{tpu_custom_call.1} parent=5 // pred_fallthru
        _
    $region6: #{tpu_custom_call.1} parent=1 // loop_footer
      %s19 = sadd.s32 1, %s15
    $region7: #{tpu_custom_call.1} parent=1 // loop_footer_branch
      %14 = sbr.rel target = $region3
    $region8: #{tpu_custom_call.1} parent=1 // loop_exit
      _
    %1273 = vsyncpa [#allocation6], 1
    %s1274 = scalar_lea.sflag [#allocation6], 1
    %1275 = vsyncpa %s1274, 1
    %1276 = vsyncpa [#allocation9], 1
    %1277 = vsyncpa [#allocation7], 1
    %s1278 = scalar_lea.sflag [#allocation7], 1
    %1279 = vsyncpa %s1278, 1

</llo_original>
